<compile_context>
chip_gen: v7x
topology: tpu7x:2x2x1
jax: 0.10.0
libtpu: 0.0.40
codegen_flags: <defaults>
</compile_context>

<pallas_src>
import math

import jax
import jax.numpy as jnp
from jax.experimental import pallas as pl
from jax.experimental.pallas import tpu as pltpu

# ----------------------------- configuration --------------------------------
# feature_name: (vocab_size, column_index).  All features categorical so that
# torch.stack(total_embed) in the reference forward is well-defined.
USER_FEATURES = {'user_id': (100, 0), 'tab': (5, 1), 'user_age': (10, 2)}
ITEM_FEATURES = {'video_id': (200, 3), 'author_id': (50, 4), 'item_cat': (20, 5)}

EMB_DIM = 32
HIDDEN_DIM = [64, 32]
TOWER_DIM = [32, 16]                   # tower_dim[0] == hidden_dim[-1]
TASKS = ['click', 'like', 'comment', '_5s', '_10s', '_18s']
NUM_TASKS = len(TASKS)
SHARED_EXPERT = 1
OUTPUT_SIZE = 1

NUM_FEATURES = len(USER_FEATURES) + len(ITEM_FEATURES) - 3        # 3
F_PAD = 8                                                         # gate padded to 8 lanes
HIDDEN_SIZE = EMB_DIM * NUM_FEATURES                              # 96
SIDE_SIZE = 3 * EMB_DIM                                           # 96
PPNET_IN = HIDDEN_SIZE + SIDE_SIZE                                # 192
BATCH = 4


# ------------------------------ fused Pallas kernel --------------------------

def _pepnet_fused_kernel(
        epnet_in_ref, hid_ref, side_ref, sel_ref,
        ep_w0, ep_b0, ep_w1, ep_b1, ep_wl, ep_bl,
        pp_wh, pp_ws, pp_b,
        sh_w0, sh_b0, sh_w1, sh_b1,
        te_w0, te_b0, te_w1, te_b1,
        g_w, g_b,
        tw_hwc, tw_hwd, tw_hb, tw_ow, tw_ob,
        out_ref):
    f32 = jnp.float32

    def mm(x, w_ref, b_ref):
        return jnp.dot(x, w_ref[...], preferred_element_type=f32) + b_ref[...]

    # ---- EPNet MLP: (Linear -> folded BN -> Dropout[eval]) x2 -> Linear ----
    h = mm(epnet_in_ref[...], ep_w0, ep_b0)
    h = mm(h, ep_w1, ep_b1)
    ep_out = mm(h, ep_wl, ep_bl)                    # (B, F_PAD), cols >= F are 0
    ep_gate = 2.0 * jax.nn.sigmoid(ep_out)          # padded lanes killed by sel

    # ---- expand per-feature gate over the emb dim and gate the embeddings --
    gate_full = jnp.dot(ep_gate, sel_ref[...], preferred_element_type=f32)  # (B, 96)
    hidden = hid_ref[...] * gate_full                                       # (B, 96)

    # ---- ppnet gates (shared expert only): 2*sigmoid(relu(Linear([hid,side])))
    pp_lin = (jnp.dot(hidden, pp_wh[...], preferred_element_type=f32)
              + jnp.dot(side_ref[...], pp_ws[...], preferred_element_type=f32)
              + pp_b[...])                          # (B, 96) = [64 | 32]
    pp = 2.0 * jax.nn.sigmoid(jnp.maximum(pp_lin, 0.0))
    pp0 = pp[:, :HIDDEN_DIM[0]]
    pp1 = pp[:, HIDDEN_DIM[0]:]

    # ---- shared expert: (Linear -> folded BN -> Dropout -> *ppnet gate) x2 -
    se = mm(hidden, sh_w0, sh_b0) * pp0             # (B, 64)
    se = mm(se, sh_w1, sh_b1) * pp1                 # (B, 32)

    # ---- 6 task experts fused (NO ppnet gating — reference quirk):
    #      layer0 column-concatenated, layer1 block-diagonal ------------------
    te = mm(hidden, te_w0, te_b0)                   # (B, 6*64)
    te = mm(te, te_w1, te_b1)                       # (B, 6*32)

    # ---- gate (reference reuses gates_out[0]): softmax over 2 logits -------
    gl = mm(hidden, g_w, g_b)                       # (B, 2)
    gl = gl - jnp.max(gl, axis=-1, keepdims=True)
    ge = jnp.exp(gl)
    g = ge * pl.reciprocal(jnp.sum(ge, axis=-1, keepdims=True), approx=True)

    # ---- CGC combine + towers, all 6 tasks fused ----------------------------
    # cgc_t = g0*se + g1*te_t ; with a block-diagonal tower-hidden weight:
    # th = (g0*se) @ [W_1|...|W_6]  +  (g1*te) @ blockdiag(W_1..W_6)  +  b
    gse = g[:, 0:1] * se                            # (B, 32)
    g1te = g[:, 1:2] * te                           # (B, 192)
    th = (jnp.dot(gse, tw_hwc[...], preferred_element_type=f32)
          + jnp.dot(g1te, tw_hwd[...], preferred_element_type=f32)
          + tw_hb[...])                             # (B, 6*16)
    out_ref[...] = jax.nn.sigmoid(mm(th, tw_ow, tw_ob))   # (B, 6)


def pepnet_fused_call(fp, epnet_in, hid_flat, side):
    """One pallas_call for the entire post-embedding forward."""
    B = epnet_in.shape[0]
    args = (
        epnet_in, hid_flat, side, fp['sel'],
        fp['ep_w0'], fp['ep_b0'], fp['ep_w1'], fp['ep_b1'], fp['ep_wl'], fp['ep_bl'],
        fp['pp_wh'], fp['pp_ws'], fp['pp_b'],
        fp['sh_w0'], fp['sh_b0'], fp['sh_w1'], fp['sh_b1'],
        fp['te_w0'], fp['te_b0'], fp['te_w1'], fp['te_b1'],
        fp['g_w'], fp['g_b'],
        fp['tw_hwc'], fp['tw_hwd'], fp['tw_hb'], fp['tw_ow'], fp['tw_ob'],
    )
    # TODO(synk): for realistic serving/training batches, tile the batch dim
    # (M-tiles of 128/256, dimension_semantics=("parallel",)) and cast matmul
    # operands to bf16; at B=4 a single grid step with f32 is optimal.
    return pl.pallas_call(
        _pepnet_fused_kernel,
        out_shape=jax.ShapeDtypeStruct((B, NUM_TASKS), jnp.float32),
        grid=(1,),
        in_specs=[pl.BlockSpec(a.shape, lambda i: (0, 0)) for a in args],
        out_specs=pl.BlockSpec((B, NUM_TASKS), lambda i: (0, 0)),
        compiler_params=pltpu.CompilerParams(dimension_semantics=("arbitrary",)),
    )(*args)


# ------------------------- deterministic parameters --------------------------

_BASE_KEY = jax.random.PRNGKey(0)
_CNT = [0]


def _rnd(shape, scale=0.1):
    _CNT[0] += 1
    return scale * jax.random.normal(jax.random.fold_in(_BASE_KEY, _CNT[0]),
                                     shape, jnp.float32)


def _linear(k_in, k_out):
    return {'w': _rnd((k_in, k_out), 1.0 / math.sqrt(k_in)),
            'b': _rnd((1, k_out), 0.01)}


def _bn(n, eps=1e-5):
    gamma = 1.0 + _rnd((1, n), 0.1)
    beta = _rnd((1, n), 0.1)
    mean = _rnd((1, n), 0.1)
    var = 1.0 + jnp.abs(_rnd((1, n), 0.1))
    s = gamma / jnp.sqrt(var + eps)
    return {'s': s, 't': beta - mean * s}


def init_raw_params():
    p = {'emb': {}}
    for name, (num, _) in {**USER_FEATURES, **ITEM_FEATURES}.items():
        p['emb'][name] = _rnd((num, EMB_DIM), 0.1)

    ep_dims = [EMB_DIM] + HIDDEN_DIM
    p['epnet'] = [{'lin': _linear(ep_dims[j], ep_dims[j + 1]),
                   'bn': _bn(ep_dims[j + 1])} for j in range(len(ep_dims) - 1)]
    p['epnet_last'] = _linear(HIDDEN_DIM[-1], NUM_FEATURES)

    # only ppnet_1_layer_* are used in the reference forward (shared expert)
    p['ppnet_share'] = [_linear(PPNET_IN, HIDDEN_DIM[l]) for l in range(len(HIDDEN_DIM))]

    sh_dims = [HIDDEN_SIZE] + HIDDEN_DIM
    p['share'] = [{'lin': _linear(sh_dims[j], sh_dims[j + 1]),
                   'bn': _bn(sh_dims[j + 1])} for j in range(len(sh_dims) - 1)]
    p['task_expert'] = {t: [{'lin': _linear(sh_dims[j], sh_dims[j + 1]),
                             'bn': _bn(sh_dims[j + 1])}
                            for j in range(len(sh_dims) - 1)] for t in TASKS}

    # only gates_out[0] influences the outputs in the reference forward
    p['gate1'] = _linear(HIDDEN_SIZE, SHARED_EXPERT + 1)

    p['tower'] = {t: {'hid': {'lin': _linear(TOWER_DIM[0], TOWER_DIM[1]),
                              'bn': _bn(TOWER_DIM[1])},
                      'out': _linear(TOWER_DIM[1], OUTPUT_SIZE)} for t in TASKS}
    return p


def _fold_bn(lin, bn):
    """Fold eval-mode BatchNorm into the Linear: y = (xW+b)*s + t == x(W*s) + (b*s+t)."""
    return lin['w'] * bn['s'], lin['b'] * bn['s'] + bn['t']


def _block_diag(blocks):
    K = sum(b.shape[0] for b in blocks)
    N = sum(b.shape[1] for b in blocks)
    out = jnp.zeros((K, N), jnp.float32)
    ko = no = 0
    for blk in blocks:
        out = out.at[ko:ko + blk.shape[0], no:no + blk.shape[1]].set(blk)
        ko += blk.shape[0]
        no += blk.shape[1]
    return out


def fold_params(raw):
    """BN folding + per-task weight concatenation / block-diagonalisation (done once)."""
    fp = {'emb': raw['emb']}

    # EPNet
    fp['ep_w0'], fp['ep_b0'] = _fold_bn(raw['epnet'][0]['lin'], raw['epnet'][0]['bn'])
    fp['ep_w1'], fp['ep_b1'] = _fold_bn(raw['epnet'][1]['lin'], raw['epnet'][1]['bn'])
    fp['ep_wl'] = jnp.pad(raw['epnet_last']['w'], ((0, 0), (0, F_PAD - NUM_FEATURES)))
    fp['ep_bl'] = jnp.pad(raw['epnet_last']['b'], ((0, 0), (0, F_PAD - NUM_FEATURES)))
    sel = jnp.zeros((F_PAD, HIDDEN_SIZE), jnp.float32)
    for f in range(NUM_FEATURES):
        sel = sel.at[f, f * EMB_DIM:(f + 1) * EMB_DIM].set(1.0)
    fp['sel'] = sel

    # PPNet: the two projections concatenated along N, K split into [hidden | side]
    pp_w = jnp.concatenate([lp['w'] for lp in raw['ppnet_share']], axis=1)   # (192, 96)
    fp['pp_wh'] = pp_w[:HIDDEN_SIZE, :]
    fp['pp_ws'] = pp_w[HIDDEN_SIZE:, :]
    fp['pp_b'] = jnp.concatenate([lp['b'] for lp in raw['ppnet_share']], axis=1)

    # shared expert
    fp['sh_w0'], fp['sh_b0'] = _fold_bn(raw['share'][0]['lin'], raw['share'][0]['bn'])
    fp['sh_w1'], fp['sh_b1'] = _fold_bn(raw['share'][1]['lin'], raw['share'][1]['bn'])

    # 6 task experts: layer0 concatenated along N, layer1 block-diagonal
    w0s, b0s, w1s, b1s = [], [], [], []
    for t in TASKS:
        w0, b0 = _fold_bn(raw['task_expert'][t][0]['lin'], raw['task_expert'][t][0]['bn'])
        w1, b1 = _fold_bn(raw['task_expert'][t][1]['lin'], raw['task_expert'][t][1]['bn'])
        w0s.append(w0); b0s.append(b0); w1s.append(w1); b1s.append(b1)
    fp['te_w0'] = jnp.concatenate(w0s, axis=1)          # (96, 384)
    fp['te_b0'] = jnp.concatenate(b0s, axis=1)          # (1, 384)
    fp['te_w1'] = _block_diag(w1s)                      # (384, 192)
    fp['te_b1'] = jnp.concatenate(b1s, axis=1)          # (1, 192)

    # gate 1 (the only gate the reference actually uses)
    fp['g_w'], fp['g_b'] = raw['gate1']['w'], raw['gate1']['b']

    # 6 towers: hidden layer as column-concat (for the shared-expert term) and
    # block-diag (for the per-task term); output layer block-diag -> (B, 6)
    hws, hbs, ows, obs = [], [], [], []
    for t in TASKS:
        hw, hb = _fold_bn(raw['tower'][t]['hid']['lin'], raw['tower'][t]['hid']['bn'])
        hws.append(hw); hbs.append(hb)
        ows.append(raw['tower'][t]['out']['w']); obs.append(raw['tower'][t]['out']['b'])
    fp['tw_hwc'] = jnp.concatenate(hws, axis=1)         # (32, 96)
    fp['tw_hwd'] = _block_diag(hws)                     # (192, 96)
    fp['tw_hb'] = jnp.concatenate(hbs, axis=1)          # (1, 96)
    fp['tw_ow'] = _block_diag(ows)                      # (96, 6)
    fp['tw_ob'] = jnp.concatenate(obs, axis=1)          # (1, 6)
    return fp


# ------------------------------- forward pass --------------------------------

def _gather_embeddings(emb, x):
    xi = x.astype(jnp.int32)
    user_embeds, item_embeds, scene_embeds, side_embeds = [], [], [], []
    scene_feature = None
    for name, (_, idx) in USER_FEATURES.items():
        e = jnp.take(emb[name], xi[:, idx], axis=0)
        if name == 'user_id':
            side_embeds.append(e)
        elif name == 'tab':
            scene_embeds.append(e)
            scene_feature = xi[:, idx]
        else:
            user_embeds.append(e)
    for name, (_, idx) in ITEM_FEATURES.items():
        e = jnp.take(emb[name], xi[:, idx], axis=0)
        if name in ('video_id', 'author_id'):
            side_embeds.append(e)
        else:
            item_embeds.append(e)
    return user_embeds, item_embeds, scene_embeds, side_embeds, scene_feature


def pepnet_forward(fp, x):
    user_e, item_e, scene_e, side_e, scene_feature = _gather_embeddings(fp['emb'], x)
    user_sum = jnp.sum(jnp.stack(user_e, axis=1), axis=1)
    item_sum = jnp.sum(jnp.stack(item_e, axis=1), axis=1)
    scene_embed = jnp.concatenate(scene_e, axis=1)

    epnet_in = user_sum + item_sum + scene_embed                          # (B, E)
    hid_flat = jnp.concatenate(user_e + item_e + scene_e, axis=1)         # (B, 96)
    side = jnp.concatenate(side_e, axis=1)                                # (B, 96)

    y = pepnet_fused_call(fp, epnet_in, hid_flat, side)                   # (B, 6)
    task_outputs = [y[:, i:i + 1] for i in range(NUM_TASKS)]
    return task_outputs, scene_feature


# --------------------- pure-JAX reference (for self-check) -------------------

def pepnet_reference(raw, x):
    user_e, item_e, scene_e, side_e, scene_feature = _gather_embeddings(raw['emb'], x)
    user_sum = jnp.sum(jnp.stack(user_e, axis=1), axis=1)
    item_sum = jnp.sum(jnp.stack(item_e, axis=1), axis=1)
    scene_embed = jnp.concatenate(scene_e, axis=1)
    epnet_in = user_sum + item_sum + scene_embed
    hidden_input = jnp.stack(user_e + item_e + scene_e, axis=1)           # (B, F, E)
    side = jnp.concatenate(side_e, axis=1)

    hi = jax.lax.Precision.HIGHEST

    def lin(h, p):
        return jnp.dot(h, p['w'], precision=hi) + p['b']

    def lin_bn(h, layer):
        return lin(h, layer['lin']) * layer['bn']['s'] + layer['bn']['t']

    h = epnet_in
    for layer in raw['epnet']:
        h = lin_bn(h, layer)
    ep_gate = 2.0 * jax.nn.sigmoid(lin(h, raw['epnet_last']))             # (B, F)
    hidden = (hidden_input * ep_gate[:, :, None]).reshape(x.shape[0], HIDDEN_SIZE)

    ppnet_in = jnp.concatenate([hidden, side], axis=1)
    pp = [2.0 * jax.nn.sigmoid(jnp.maximum(lin(ppnet_in, lp), 0.0))
          for lp in raw['ppnet_share']]

    se = hidden
    for j, layer in enumerate(raw['share']):
        se = lin_bn(se, layer) * pp[j]

    task_experts = []
    for t in TASKS:
        te = hidden
        for layer in raw['task_expert'][t]:
            te = lin_bn(te, layer)
        task_experts.append(te)

    g = jax.nn.softmax(lin(hidden, raw['gate1']), axis=-1)

    outs = []
    for i, t in enumerate(TASKS):
        cgc = g[:, 0:1] * se + g[:, 1:2] * task_experts[i]
        tw = raw['tower'][t]
        th = lin_bn(cgc, tw['hid'])
        outs.append(jax.nn.sigmoid(lin(th, tw['out'])))
    return outs, scene_feature


# ----------------------------------- main ------------------------------------

if __name__ == "__main__":
    raw_params = init_raw_params()
    fused_params = fold_params(raw_params)

    key = jax.random.PRNGKey(0)
    all_feats = {**USER_FEATURES, **ITEM_FEATURES}
    cols = [None] * len(all_feats)
    for name, (vocab, idx) in all_feats.items():
        sub = jax.random.fold_in(key, 1000 + idx)
        cols[idx] = jax.random.randint(sub, (BATCH,), 0, vocab).astype(jnp.float32)
    x = jnp.stack(cols, axis=1)                     # (BATCH, 6) float indices

    fwd = jax.jit(pepnet_forward)
    task_outputs, scene_feature = fwd(fused_params, x)
    jax.block_until_ready((task_outputs, scene_feature))

    assert len(task_outputs) == NUM_TASKS
    assert all(o.shape == (BATCH, OUTPUT_SIZE) for o in task_outputs)
    assert scene_feature.shape == (BATCH,)

    # self-check against a pure-JAX reference of the original (un-fused) graph
    ref_outputs, ref_scene = jax.jit(pepnet_reference)(raw_params, x)
    jax.block_until_ready((ref_outputs, ref_scene))
    for got, want in zip(task_outputs, ref_outputs):
        err = float(jnp.max(jnp.abs(got - want)))
        assert err < 2e-2, f"fused kernel mismatch vs reference: {err}"
    assert bool(jnp.all(scene_feature == ref_scene))

    print("KERNEL_OK")
</pallas_src>

<mosaic_0001>
module attributes {stable_mosaic.version = 11 : i64} {
  func.func @_pepnet_fused_kernel(%arg0: i32, %arg1: memref<4x32xf32, #tpu.memory_space<vmem>>, %arg2: memref<4x96xf32, #tpu.memory_space<vmem>>, %arg3: memref<4x96xf32, #tpu.memory_space<vmem>>, %arg4: memref<8x96xf32, #tpu.memory_space<vmem>>, %arg5: memref<32x64xf32, #tpu.memory_space<vmem>>, %arg6: memref<1x64xf32, #tpu.memory_space<vmem>>, %arg7: memref<64x32xf32, #tpu.memory_space<vmem>>, %arg8: memref<1x32xf32, #tpu.memory_space<vmem>>, %arg9: memref<32x8xf32, #tpu.memory_space<vmem>>, %arg10: memref<1x8xf32, #tpu.memory_space<vmem>>, %arg11: memref<96x96xf32, #tpu.memory_space<vmem>>, %arg12: memref<96x96xf32, #tpu.memory_space<vmem>>, %arg13: memref<1x96xf32, #tpu.memory_space<vmem>>, %arg14: memref<96x64xf32, #tpu.memory_space<vmem>>, %arg15: memref<1x64xf32, #tpu.memory_space<vmem>>, %arg16: memref<64x32xf32, #tpu.memory_space<vmem>>, %arg17: memref<1x32xf32, #tpu.memory_space<vmem>>, %arg18: memref<96x384xf32, #tpu.memory_space<vmem>>, %arg19: memref<1x384xf32, #tpu.memory_space<vmem>>, %arg20: memref<384x192xf32, #tpu.memory_space<vmem>>, %arg21: memref<1x192xf32, #tpu.memory_space<vmem>>, %arg22: memref<96x2xf32, #tpu.memory_space<vmem>>, %arg23: memref<1x2xf32, #tpu.memory_space<vmem>>, %arg24: memref<32x96xf32, #tpu.memory_space<vmem>>, %arg25: memref<192x96xf32, #tpu.memory_space<vmem>>, %arg26: memref<1x96xf32, #tpu.memory_space<vmem>>, %arg27: memref<96x6xf32, #tpu.memory_space<vmem>>, %arg28: memref<1x6xf32, #tpu.memory_space<vmem>>, %arg29: memref<4x6xf32, #tpu.memory_space<vmem>>) attributes {dimension_semantics = [#tpu.dimension_semantics<arbitrary>], iteration_bounds = array<i64: 1>, scalar_prefetch = 0 : i64, scratch_operands = 0 : i64, tpu.core_type = #tpu.core_type<tc>, window_params = [{pipeline_mode = #tpu.pipeline_mode<synchronous>, transform_indices = @transform_0, window_bounds = array<i64: 4, 32>}, {pipeline_mode = #tpu.pipeline_mode<synchronous>, transform_indices = @transform_1, window_bounds = array<i64: 4, 96>}, {pipeline_mode = #tpu.pipeline_mode<synchronous>, transform_indices = @transform_2, window_bounds = array<i64: 4, 96>}, {pipeline_mode = #tpu.pipeline_mode<synchronous>, transform_indices = @transform_3, window_bounds = array<i64: 8, 96>}, {pipeline_mode = #tpu.pipeline_mode<synchronous>, transform_indices = @transform_4, window_bounds = array<i64: 32, 64>}, {pipeline_mode = #tpu.pipeline_mode<synchronous>, transform_indices = @transform_5, window_bounds = array<i64: 1, 64>}, {pipeline_mode = #tpu.pipeline_mode<synchronous>, transform_indices = @transform_6, window_bounds = array<i64: 64, 32>}, {pipeline_mode = #tpu.pipeline_mode<synchronous>, transform_indices = @transform_7, window_bounds = array<i64: 1, 32>}, {pipeline_mode = #tpu.pipeline_mode<synchronous>, transform_indices = @transform_8, window_bounds = array<i64: 32, 8>}, {pipeline_mode = #tpu.pipeline_mode<synchronous>, transform_indices = @transform_9, window_bounds = array<i64: 1, 8>}, {pipeline_mode = #tpu.pipeline_mode<synchronous>, transform_indices = @transform_10, window_bounds = array<i64: 96, 96>}, {pipeline_mode = #tpu.pipeline_mode<synchronous>, transform_indices = @transform_11, window_bounds = array<i64: 96, 96>}, {pipeline_mode = #tpu.pipeline_mode<synchronous>, transform_indices = @transform_12, window_bounds = array<i64: 1, 96>}, {pipeline_mode = #tpu.pipeline_mode<synchronous>, transform_indices = @transform_13, window_bounds = array<i64: 96, 64>}, {pipeline_mode = #tpu.pipeline_mode<synchronous>, transform_indices = @transform_14, window_bounds = array<i64: 1, 64>}, {pipeline_mode = #tpu.pipeline_mode<synchronous>, transform_indices = @transform_15, window_bounds = array<i64: 64, 32>}, {pipeline_mode = #tpu.pipeline_mode<synchronous>, transform_indices = @transform_16, window_bounds = array<i64: 1, 32>}, {pipeline_mode = #tpu.pipeline_mode<synchronous>, transform_indices = @transform_17, window_bounds = array<i64: 96, 384>}, {pipeline_mode = #tpu.pipeline_mode<synchronous>, transform_indices = @transform_18, window_bounds = array<i64: 1, 384>}, {pipeline_mode = #tpu.pipeline_mode<synchronous>, transform_indices = @transform_19, window_bounds = array<i64: 384, 192>}, {pipeline_mode = #tpu.pipeline_mode<synchronous>, transform_indices = @transform_20, window_bounds = array<i64: 1, 192>}, {pipeline_mode = #tpu.pipeline_mode<synchronous>, transform_indices = @transform_21, window_bounds = array<i64: 96, 2>}, {pipeline_mode = #tpu.pipeline_mode<synchronous>, transform_indices = @transform_22, window_bounds = array<i64: 1, 2>}, {pipeline_mode = #tpu.pipeline_mode<synchronous>, transform_indices = @transform_23, window_bounds = array<i64: 32, 96>}, {pipeline_mode = #tpu.pipeline_mode<synchronous>, transform_indices = @transform_24, window_bounds = array<i64: 192, 96>}, {pipeline_mode = #tpu.pipeline_mode<synchronous>, transform_indices = @transform_25, window_bounds = array<i64: 1, 96>}, {pipeline_mode = #tpu.pipeline_mode<synchronous>, transform_indices = @transform_26, window_bounds = array<i64: 96, 6>}, {pipeline_mode = #tpu.pipeline_mode<synchronous>, transform_indices = @transform_27, window_bounds = array<i64: 1, 6>}, {pipeline_mode = #tpu.pipeline_mode<synchronous>, transform_indices = @transform_28, window_bounds = array<i64: 4, 6>}]} {
    %c0 = arith.constant 0 : index
    %c0_0 = arith.constant 0 : index
    %0 = vector.load %arg1[%c0, %c0_0] : memref<4x32xf32, #tpu.memory_space<vmem>>, vector<4x32xf32>
    %c0_1 = arith.constant 0 : index
    %c0_2 = arith.constant 0 : index
    %1 = vector.load %arg5[%c0_1, %c0_2] : memref<32x64xf32, #tpu.memory_space<vmem>>, vector<32x64xf32>
    %cst = arith.constant dense<0.000000e+00> : vector<4x64xf32>
    %2 = tpu.matmul %0, %1, %cst {dimension_numbers = #tpu.dot_dimension_numbers<[1], [0], [0], [1], [0, 0, 1, 1], [], []>} : vector<4x32xf32>, vector<32x64xf32>, vector<4x64xf32> -> vector<4x64xf32>
    %c0_3 = arith.constant 0 : index
    %c0_4 = arith.constant 0 : index
    %3 = vector.load %arg6[%c0_3, %c0_4] : memref<1x64xf32, #tpu.memory_space<vmem>>, vector<1x64xf32>
    %4 = vector.broadcast %3 : vector<1x64xf32> to vector<4x64xf32>
    %5 = arith.addf %2, %4 : vector<4x64xf32>
    %c0_5 = arith.constant 0 : index
    %c0_6 = arith.constant 0 : index
    %6 = vector.load %arg7[%c0_5, %c0_6] : memref<64x32xf32, #tpu.memory_space<vmem>>, vector<64x32xf32>
    %cst_7 = arith.constant dense<0.000000e+00> : vector<4x32xf32>
    %7 = tpu.matmul %5, %6, %cst_7 {dimension_numbers = #tpu.dot_dimension_numbers<[1], [0], [0], [1], [0, 0, 1, 1], [], []>} : vector<4x64xf32>, vector<64x32xf32>, vector<4x32xf32> -> vector<4x32xf32>
    %c0_8 = arith.constant 0 : index
    %c0_9 = arith.constant 0 : index
    %8 = vector.load %arg8[%c0_8, %c0_9] : memref<1x32xf32, #tpu.memory_space<vmem>>, vector<1x32xf32>
    %9 = vector.broadcast %8 : vector<1x32xf32> to vector<4x32xf32>
    %10 = arith.addf %7, %9 : vector<4x32xf32>
    %c0_10 = arith.constant 0 : index
    %c0_11 = arith.constant 0 : index
    %11 = vector.load %arg9[%c0_10, %c0_11] : memref<32x8xf32, #tpu.memory_space<vmem>>, vector<32x8xf32>
    %cst_12 = arith.constant dense<0.000000e+00> : vector<4x8xf32>
    %12 = tpu.matmul %10, %11, %cst_12 {dimension_numbers = #tpu.dot_dimension_numbers<[1], [0], [0], [1], [0, 0, 1, 1], [], []>} : vector<4x32xf32>, vector<32x8xf32>, vector<4x8xf32> -> vector<4x8xf32>
    %c0_13 = arith.constant 0 : index
    %c0_14 = arith.constant 0 : index
    %13 = vector.load %arg10[%c0_13, %c0_14] : memref<1x8xf32, #tpu.memory_space<vmem>>, vector<1x8xf32>
    %14 = vector.broadcast %13 : vector<1x8xf32> to vector<4x8xf32>
    %15 = arith.addf %12, %14 : vector<4x8xf32>
    %16 = arith.negf %15 : vector<4x8xf32>
    %17 = math.exp %16 : vector<4x8xf32>
    %cst_15 = arith.constant 1.000000e+00 : f32
    %18 = vector.broadcast %cst_15 : f32 to vector<4x8xf32>
    %19 = arith.addf %18, %17 : vector<4x8xf32>
    %20 = arith.divf %18, %19 : vector<4x8xf32>
    %cst_16 = arith.constant 2.000000e+00 : f32
    %21 = vector.broadcast %cst_16 : f32 to vector<4x8xf32>
    %22 = arith.mulf %21, %20 : vector<4x8xf32>
    %c0_17 = arith.constant 0 : index
    %c0_18 = arith.constant 0 : index
    %23 = vector.load %arg4[%c0_17, %c0_18] : memref<8x96xf32, #tpu.memory_space<vmem>>, vector<8x96xf32>
    %cst_19 = arith.constant dense<0.000000e+00> : vector<4x96xf32>
    %24 = tpu.matmul %22, %23, %cst_19 {dimension_numbers = #tpu.dot_dimension_numbers<[1], [0], [0], [1], [0, 0, 1, 1], [], []>} : vector<4x8xf32>, vector<8x96xf32>, vector<4x96xf32> -> vector<4x96xf32>
    %c0_20 = arith.constant 0 : index
    %c0_21 = arith.constant 0 : index
    %25 = vector.load %arg2[%c0_20, %c0_21] : memref<4x96xf32, #tpu.memory_space<vmem>>, vector<4x96xf32>
    %26 = arith.mulf %25, %24 : vector<4x96xf32>
    %c0_22 = arith.constant 0 : index
    %c0_23 = arith.constant 0 : index
    %27 = vector.load %arg11[%c0_22, %c0_23] : memref<96x96xf32, #tpu.memory_space<vmem>>, vector<96x96xf32>
    %cst_24 = arith.constant dense<0.000000e+00> : vector<4x96xf32>
    %28 = tpu.matmul %26, %27, %cst_24 {dimension_numbers = #tpu.dot_dimension_numbers<[1], [0], [0], [1], [0, 0, 1, 1], [], []>} : vector<4x96xf32>, vector<96x96xf32>, vector<4x96xf32> -> vector<4x96xf32>
    %c0_25 = arith.constant 0 : index
    %c0_26 = arith.constant 0 : index
    %29 = vector.load %arg3[%c0_25, %c0_26] : memref<4x96xf32, #tpu.memory_space<vmem>>, vector<4x96xf32>
    %c0_27 = arith.constant 0 : index
    %c0_28 = arith.constant 0 : index
    %30 = vector.load %arg12[%c0_27, %c0_28] : memref<96x96xf32, #tpu.memory_space<vmem>>, vector<96x96xf32>
    %cst_29 = arith.constant dense<0.000000e+00> : vector<4x96xf32>
    %31 = tpu.matmul %29, %30, %cst_29 {dimension_numbers = #tpu.dot_dimension_numbers<[1], [0], [0], [1], [0, 0, 1, 1], [], []>} : vector<4x96xf32>, vector<96x96xf32>, vector<4x96xf32> -> vector<4x96xf32>
    %32 = arith.addf %28, %31 : vector<4x96xf32>
    %c0_30 = arith.constant 0 : index
    %c0_31 = arith.constant 0 : index
    %33 = vector.load %arg13[%c0_30, %c0_31] : memref<1x96xf32, #tpu.memory_space<vmem>>, vector<1x96xf32>
    %34 = vector.broadcast %33 : vector<1x96xf32> to vector<4x96xf32>
    %35 = arith.addf %32, %34 : vector<4x96xf32>
    %cst_32 = arith.constant 0.000000e+00 : f32
    %36 = vector.broadcast %cst_32 : f32 to vector<4x96xf32>
    %37 = arith.maximumf %35, %36 : vector<4x96xf32>
    %38 = arith.negf %37 : vector<4x96xf32>
    %39 = math.exp %38 : vector<4x96xf32>
    %cst_33 = arith.constant 1.000000e+00 : f32
    %40 = vector.broadcast %cst_33 : f32 to vector<4x96xf32>
    %41 = arith.addf %40, %39 : vector<4x96xf32>
    %42 = arith.divf %40, %41 : vector<4x96xf32>
    %cst_34 = arith.constant 2.000000e+00 : f32
    %43 = vector.broadcast %cst_34 : f32 to vector<4x96xf32>
    %44 = arith.mulf %43, %42 : vector<4x96xf32>
    %45 = vector.extract_strided_slice %44 {offsets = [0, 0], sizes = [4, 64], strides = [1, 1]} : vector<4x96xf32> to vector<4x64xf32>
    %46 = vector.extract_strided_slice %44 {offsets = [0, 64], sizes = [4, 32], strides = [1, 1]} : vector<4x96xf32> to vector<4x32xf32>
    %c0_35 = arith.constant 0 : index
    %c0_36 = arith.constant 0 : index
    %47 = vector.load %arg14[%c0_35, %c0_36] : memref<96x64xf32, #tpu.memory_space<vmem>>, vector<96x64xf32>
    %cst_37 = arith.constant dense<0.000000e+00> : vector<4x64xf32>
    %48 = tpu.matmul %26, %47, %cst_37 {dimension_numbers = #tpu.dot_dimension_numbers<[1], [0], [0], [1], [0, 0, 1, 1], [], []>} : vector<4x96xf32>, vector<96x64xf32>, vector<4x64xf32> -> vector<4x64xf32>
    %c0_38 = arith.constant 0 : index
    %c0_39 = arith.constant 0 : index
    %49 = vector.load %arg15[%c0_38, %c0_39] : memref<1x64xf32, #tpu.memory_space<vmem>>, vector<1x64xf32>
    %50 = vector.broadcast %49 : vector<1x64xf32> to vector<4x64xf32>
    %51 = arith.addf %48, %50 : vector<4x64xf32>
    %52 = arith.mulf %51, %45 : vector<4x64xf32>
    %c0_40 = arith.constant 0 : index
    %c0_41 = arith.constant 0 : index
    %53 = vector.load %arg16[%c0_40, %c0_41] : memref<64x32xf32, #tpu.memory_space<vmem>>, vector<64x32xf32>
    %cst_42 = arith.constant dense<0.000000e+00> : vector<4x32xf32>
    %54 = tpu.matmul %52, %53, %cst_42 {dimension_numbers = #tpu.dot_dimension_numbers<[1], [0], [0], [1], [0, 0, 1, 1], [], []>} : vector<4x64xf32>, vector<64x32xf32>, vector<4x32xf32> -> vector<4x32xf32>
    %c0_43 = arith.constant 0 : index
    %c0_44 = arith.constant 0 : index
    %55 = vector.load %arg17[%c0_43, %c0_44] : memref<1x32xf32, #tpu.memory_space<vmem>>, vector<1x32xf32>
    %56 = vector.broadcast %55 : vector<1x32xf32> to vector<4x32xf32>
    %57 = arith.addf %54, %56 : vector<4x32xf32>
    %58 = arith.mulf %57, %46 : vector<4x32xf32>
    %c0_45 = arith.constant 0 : index
    %c0_46 = arith.constant 0 : index
    %59 = vector.load %arg18[%c0_45, %c0_46] : memref<96x384xf32, #tpu.memory_space<vmem>>, vector<96x384xf32>
    %cst_47 = arith.constant dense<0.000000e+00> : vector<4x384xf32>
    %60 = tpu.matmul %26, %59, %cst_47 {dimension_numbers = #tpu.dot_dimension_numbers<[1], [0], [0], [1], [0, 0, 1, 1], [], []>} : vector<4x96xf32>, vector<96x384xf32>, vector<4x384xf32> -> vector<4x384xf32>
    %c0_48 = arith.constant 0 : index
    %c0_49 = arith.constant 0 : index
    %61 = vector.load %arg19[%c0_48, %c0_49] : memref<1x384xf32, #tpu.memory_space<vmem>>, vector<1x384xf32>
    %62 = vector.broadcast %61 : vector<1x384xf32> to vector<4x384xf32>
    %63 = arith.addf %60, %62 : vector<4x384xf32>
    %c0_50 = arith.constant 0 : index
    %c0_51 = arith.constant 0 : index
    %64 = vector.load %arg20[%c0_50, %c0_51] : memref<384x192xf32, #tpu.memory_space<vmem>>, vector<384x192xf32>
    %cst_52 = arith.constant dense<0.000000e+00> : vector<4x192xf32>
    %65 = tpu.matmul %63, %64, %cst_52 {dimension_numbers = #tpu.dot_dimension_numbers<[1], [0], [0], [1], [0, 0, 1, 1], [], []>} : vector<4x384xf32>, vector<384x192xf32>, vector<4x192xf32> -> vector<4x192xf32>
    %c0_53 = arith.constant 0 : index
    %c0_54 = arith.constant 0 : index
    %66 = vector.load %arg21[%c0_53, %c0_54] : memref<1x192xf32, #tpu.memory_space<vmem>>, vector<1x192xf32>
    %67 = vector.broadcast %66 : vector<1x192xf32> to vector<4x192xf32>
    %68 = arith.addf %65, %67 : vector<4x192xf32>
    %c0_55 = arith.constant 0 : index
    %c0_56 = arith.constant 0 : index
    %69 = vector.load %arg22[%c0_55, %c0_56] : memref<96x2xf32, #tpu.memory_space<vmem>>, vector<96x2xf32>
    %cst_57 = arith.constant dense<0.000000e+00> : vector<4x2xf32>
    %70 = tpu.matmul %26, %69, %cst_57 {dimension_numbers = #tpu.dot_dimension_numbers<[1], [0], [0], [1], [0, 0, 1, 1], [], []>} : vector<4x96xf32>, vector<96x2xf32>, vector<4x2xf32> -> vector<4x2xf32>
    %c0_58 = arith.constant 0 : index
    %c0_59 = arith.constant 0 : index
    %71 = vector.load %arg23[%c0_58, %c0_59] : memref<1x2xf32, #tpu.memory_space<vmem>>, vector<1x2xf32>
    %72 = vector.broadcast %71 : vector<1x2xf32> to vector<4x2xf32>
    %73 = arith.addf %70, %72 : vector<4x2xf32>
    %cst_60 = arith.constant dense<0xFF800000> : vector<4xf32>
    %74 = vector.multi_reduction <maximumf>, %73, %cst_60 [1] : vector<4x2xf32> to vector<4xf32>
    %75 = vector.shape_cast %74 : vector<4xf32> to vector<4x1xf32>
    %76 = vector.broadcast %75 : vector<4x1xf32> to vector<4x2xf32>
    %77 = arith.subf %73, %76 : vector<4x2xf32>
    %78 = math.exp %77 : vector<4x2xf32>
    %cst_61 = arith.constant dense<0.000000e+00> : vector<4xf32>
    %79 = vector.multi_reduction <add>, %78, %cst_61 [1] : vector<4x2xf32> to vector<4xf32>
    %80 = vector.shape_cast %79 : vector<4xf32> to vector<4x1xf32>
    %81 = tpu.reciprocal %80 {approx = true} : vector<4x1xf32> -> vector<4x1xf32>
    %82 = vector.broadcast %81 : vector<4x1xf32> to vector<4x2xf32>
    %83 = arith.mulf %78, %82 : vector<4x2xf32>
    %84 = vector.extract_strided_slice %83 {offsets = [0, 0], sizes = [4, 1], strides = [1, 1]} : vector<4x2xf32> to vector<4x1xf32>
    %85 = vector.broadcast %84 : vector<4x1xf32> to vector<4x32xf32>
    %86 = arith.mulf %85, %58 : vector<4x32xf32>
    %87 = vector.extract_strided_slice %83 {offsets = [0, 1], sizes = [4, 1], strides = [1, 1]} : vector<4x2xf32> to vector<4x1xf32>
    %88 = vector.broadcast %87 : vector<4x1xf32> to vector<4x192xf32>
    %89 = arith.mulf %88, %68 : vector<4x192xf32>
    %c0_62 = arith.constant 0 : index
    %c0_63 = arith.constant 0 : index
    %90 = vector.load %arg24[%c0_62, %c0_63] : memref<32x96xf32, #tpu.memory_space<vmem>>, vector<32x96xf32>
    %cst_64 = arith.constant dense<0.000000e+00> : vector<4x96xf32>
    %91 = tpu.matmul %86, %90, %cst_64 {dimension_numbers = #tpu.dot_dimension_numbers<[1], [0], [0], [1], [0, 0, 1, 1], [], []>} : vector<4x32xf32>, vector<32x96xf32>, vector<4x96xf32> -> vector<4x96xf32>
    %c0_65 = arith.constant 0 : index
    %c0_66 = arith.constant 0 : index
    %92 = vector.load %arg25[%c0_65, %c0_66] : memref<192x96xf32, #tpu.memory_space<vmem>>, vector<192x96xf32>
    %cst_67 = arith.constant dense<0.000000e+00> : vector<4x96xf32>
    %93 = tpu.matmul %89, %92, %cst_67 {dimension_numbers = #tpu.dot_dimension_numbers<[1], [0], [0], [1], [0, 0, 1, 1], [], []>} : vector<4x192xf32>, vector<192x96xf32>, vector<4x96xf32> -> vector<4x96xf32>
    %94 = arith.addf %91, %93 : vector<4x96xf32>
    %c0_68 = arith.constant 0 : index
    %c0_69 = arith.constant 0 : index
    %95 = vector.load %arg26[%c0_68, %c0_69] : memref<1x96xf32, #tpu.memory_space<vmem>>, vector<1x96xf32>
    %96 = vector.broadcast %95 : vector<1x96xf32> to vector<4x96xf32>
    %97 = arith.addf %94, %96 : vector<4x96xf32>
    %c0_70 = arith.constant 0 : index
    %c0_71 = arith.constant 0 : index
    %98 = vector.load %arg27[%c0_70, %c0_71] : memref<96x6xf32, #tpu.memory_space<vmem>>, vector<96x6xf32>
    %cst_72 = arith.constant dense<0.000000e+00> : vector<4x6xf32>
    %99 = tpu.matmul %97, %98, %cst_72 {dimension_numbers = #tpu.dot_dimension_numbers<[1], [0], [0], [1], [0, 0, 1, 1], [], []>} : vector<4x96xf32>, vector<96x6xf32>, vector<4x6xf32> -> vector<4x6xf32>
    %c0_73 = arith.constant 0 : index
    %c0_74 = arith.constant 0 : index
    %100 = vector.load %arg28[%c0_73, %c0_74] : memref<1x6xf32, #tpu.memory_space<vmem>>, vector<1x6xf32>
    %101 = vector.broadcast %100 : vector<1x6xf32> to vector<4x6xf32>
    %102 = arith.addf %99, %101 : vector<4x6xf32>
    %103 = arith.negf %102 : vector<4x6xf32>
    %104 = math.exp %103 : vector<4x6xf32>
    %cst_75 = arith.constant 1.000000e+00 : f32
    %105 = vector.broadcast %cst_75 : f32 to vector<4x6xf32>
    %106 = arith.addf %105, %104 : vector<4x6xf32>
    %107 = arith.divf %105, %106 : vector<4x6xf32>
    %c0_76 = arith.constant 0 : index
    %c0_77 = arith.constant 0 : index
    %108 = vector.load %arg29[%c0_76, %c0_77] : memref<4x6xf32, #tpu.memory_space<vmem>>, vector<4x6xf32>
    tpu.vector_store %arg29[%c0_76, %c0_77], %107 {strides = array<i32>} : memref<4x6xf32, #tpu.memory_space<vmem>>, vector<4x6xf32>,
    return
  }
  func.func @transform_0(%arg0: i32) -> (i32, i32) {
    %c0_i32 = arith.constant 0 : i32
    %c0_i32_0 = arith.constant 0 : i32
    %c0_i32_1 = arith.constant 0 : i32
    return %c0_i32, %c0_i32_0 : i32, i32
  }
  func.func @transform_1(%arg0: i32) -> (i32, i32) {
    %c0_i32 = arith.constant 0 : i32
    %c0_i32_0 = arith.constant 0 : i32
    %c0_i32_1 = arith.constant 0 : i32
    return %c0_i32, %c0_i32_0 : i32, i32
  }
  func.func @transform_2(%arg0: i32) -> (i32, i32) {
    %c0_i32 = arith.constant 0 : i32
    %c0_i32_0 = arith.constant 0 : i32
    %c0_i32_1 = arith.constant 0 : i32
    return %c0_i32, %c0_i32_0 : i32, i32
  }
  func.func @transform_3(%arg0: i32) -> (i32, i32) {
    %c0_i32 = arith.constant 0 : i32
    %c0_i32_0 = arith.constant 0 : i32
    %c0_i32_1 = arith.constant 0 : i32
    return %c0_i32, %c0_i32_0 : i32, i32
  }
  func.func @transform_4(%arg0: i32) -> (i32, i32) {
    %c0_i32 = arith.constant 0 : i32
    %c0_i32_0 = arith.constant 0 : i32
    %c0_i32_1 = arith.constant 0 : i32
    return %c0_i32, %c0_i32_0 : i32, i32
  }
  func.func @transform_5(%arg0: i32) -> (i32, i32) {
    %c0_i32 = arith.constant 0 : i32
    %c0_i32_0 = arith.constant 0 : i32
    %c0_i32_1 = arith.constant 0 : i32
    return %c0_i32, %c0_i32_0 : i32, i32
  }
  func.func @transform_6(%arg0: i32) -> (i32, i32) {
    %c0_i32 = arith.constant 0 : i32
    %c0_i32_0 = arith.constant 0 : i32
    %c0_i32_1 = arith.constant 0 : i32
    return %c0_i32, %c0_i32_0 : i32, i32
  }
  func.func @transform_7(%arg0: i32) -> (i32, i32) {
    %c0_i32 = arith.constant 0 : i32
    %c0_i32_0 = arith.constant 0 : i32
    %c0_i32_1 = arith.constant 0 : i32
    return %c0_i32, %c0_i32_0 : i32, i32
  }
  func.func @transform_8(%arg0: i32) -> (i32, i32) {
    %c0_i32 = arith.constant 0 : i32
    %c0_i32_0 = arith.constant 0 : i32
    %c0_i32_1 = arith.constant 0 : i32
    return %c0_i32, %c0_i32_0 : i32, i32
  }
  func.func @transform_9(%arg0: i32) -> (i32, i32) {
    %c0_i32 = arith.constant 0 : i32
    %c0_i32_0 = arith.constant 0 : i32
    %c0_i32_1 = arith.constant 0 : i32
    return %c0_i32, %c0_i32_0 : i32, i32
  }
  func.func @transform_10(%arg0: i32) -> (i32, i32) {
    %c0_i32 = arith.constant 0 : i32
    %c0_i32_0 = arith.constant 0 : i32
    %c0_i32_1 = arith.constant 0 : i32
    return %c0_i32, %c0_i32_0 : i32, i32
  }
  func.func @transform_11(%arg0: i32) -> (i32, i32) {
    %c0_i32 = arith.constant 0 : i32
    %c0_i32_0 = arith.constant 0 : i32
    %c0_i32_1 = arith.constant 0 : i32
    return %c0_i32, %c0_i32_0 : i32, i32
  }
  func.func @transform_12(%arg0: i32) -> (i32, i32) {
    %c0_i32 = arith.constant 0 : i32
    %c0_i32_0 = arith.constant 0 : i32
    %c0_i32_1 = arith.constant 0 : i32
    return %c0_i32, %c0_i32_0 : i32, i32
  }
  func.func @transform_13(%arg0: i32) -> (i32, i32) {
    %c0_i32 = arith.constant 0 : i32
    %c0_i32_0 = arith.constant 0 : i32
    %c0_i32_1 = arith.constant 0 : i32
    return %c0_i32, %c0_i32_0 : i32, i32
  }
  func.func @transform_14(%arg0: i32) -> (i32, i32) {
    %c0_i32 = arith.constant 0 : i32
    %c0_i32_0 = arith.constant 0 : i32
    %c0_i32_1 = arith.constant 0 : i32
    return %c0_i32, %c0_i32_0 : i32, i32
  }
  func.func @transform_15(%arg0: i32) -> (i32, i32) {
    %c0_i32 = arith.constant 0 : i32
    %c0_i32_0 = arith.constant 0 : i32
    %c0_i32_1 = arith.constant 0 : i32
    return %c0_i32, %c0_i32_0 : i32, i32
  }
  func.func @transform_16(%arg0: i32) -> (i32, i32) {
    %c0_i32 = arith.constant 0 : i32
    %c0_i32_0 = arith.constant 0 : i32
    %c0_i32_1 = arith.constant 0 : i32
    return %c0_i32, %c0_i32_0 : i32, i32
  }
  func.func @transform_17(%arg0: i32) -> (i32, i32) {
    %c0_i32 = arith.constant 0 : i32
    %c0_i32_0 = arith.constant 0 : i32
    %c0_i32_1 = arith.constant 0 : i32
    return %c0_i32, %c0_i32_0 : i32, i32
  }
  func.func @transform_18(%arg0: i32) -> (i32, i32) {
    %c0_i32 = arith.constant 0 : i32
    %c0_i32_0 = arith.constant 0 : i32
    %c0_i32_1 = arith.constant 0 : i32
    return %c0_i32, %c0_i32_0 : i32, i32
  }
  func.func @transform_19(%arg0: i32) -> (i32, i32) {
    %c0_i32 = arith.constant 0 : i32
    %c0_i32_0 = arith.constant 0 : i32
    %c0_i32_1 = arith.constant 0 : i32
    return %c0_i32, %c0_i32_0 : i32, i32
  }
  func.func @transform_20(%arg0: i32) -> (i32, i32) {
    %c0_i32 = arith.constant 0 : i32
    %c0_i32_0 = arith.constant 0 : i32
    %c0_i32_1 = arith.constant 0 : i32
    return %c0_i32, %c0_i32_0 : i32, i32
  }
  func.func @transform_21(%arg0: i32) -> (i32, i32) {
    %c0_i32 = arith.constant 0 : i32
    %c0_i32_0 = arith.constant 0 : i32
    %c0_i32_1 = arith.constant 0 : i32
    return %c0_i32, %c0_i32_0 : i32, i32
  }
  func.func @transform_22(%arg0: i32) -> (i32, i32) {
    %c0_i32 = arith.constant 0 : i32
    %c0_i32_0 = arith.constant 0 : i32
    %c0_i32_1 = arith.constant 0 : i32
    return %c0_i32, %c0_i32_0 : i32, i32
  }
  func.func @transform_23(%arg0: i32) -> (i32, i32) {
    %c0_i32 = arith.constant 0 : i32
    %c0_i32_0 = arith.constant 0 : i32
    %c0_i32_1 = arith.constant 0 : i32
    return %c0_i32, %c0_i32_0 : i32, i32
  }
  func.func @transform_24(%arg0: i32) -> (i32, i32) {
    %c0_i32 = arith.constant 0 : i32
    %c0_i32_0 = arith.constant 0 : i32
    %c0_i32_1 = arith.constant 0 : i32
    return %c0_i32, %c0_i32_0 : i32, i32
  }
  func.func @transform_25(%arg0: i32) -> (i32, i32) {
    %c0_i32 = arith.constant 0 : i32
    %c0_i32_0 = arith.constant 0 : i32
    %c0_i32_1 = arith.constant 0 : i32
    return %c0_i32, %c0_i32_0 : i32, i32
  }
  func.func @transform_26(%arg0: i32) -> (i32, i32) {
    %c0_i32 = arith.constant 0 : i32
    %c0_i32_0 = arith.constant 0 : i32
    %c0_i32_1 = arith.constant 0 : i32
    return %c0_i32, %c0_i32_0 : i32, i32
  }
  func.func @transform_27(%arg0: i32) -> (i32, i32) {
    %c0_i32 = arith.constant 0 : i32
    %c0_i32_0 = arith.constant 0 : i32
    %c0_i32_1 = arith.constant 0 : i32
    return %c0_i32, %c0_i32_0 : i32, i32
  }
  func.func @transform_28(%arg0: i32) -> (i32, i32) {
    %c0_i32 = arith.constant 0 : i32
    %c0_i32_0 = arith.constant 0 : i32
    %c0_i32_1 = arith.constant 0 : i32
    return %c0_i32, %c0_i32_0 : i32, i32
  }
}

</mosaic_0001>

<llo_original>
// kernel: pepnet_forward.1
$region0: #{pepnet_forward.1}
  #allocation0 [shape = 'u32[]', space=smem, size = 0x4, offset = 0x4, fixed_abs, tag = 'smem constant byte address 0x4 - core index']
  #allocation1 [shape = 'u32[144,128]{1,0:T(1,128)}', space=vmem, size = 0x12000, scoped, tag = 'internal scratch']
  %s0 = inlined_call_operand.vmem [shape: f32[4,32], index: 0, kind: input, shape index: {}]
  %s1 = inlined_call_operand.vmem [shape: f32[4,96], index: 1, kind: input, shape index: {}]
  %s2 = inlined_call_operand.vmem [shape: f32[4,96], index: 2, kind: input, shape index: {}]
  %s3 = inlined_call_operand.vmem [shape: f32[8,96], index: 3, kind: input, shape index: {}]
  %s4 = inlined_call_operand.vmem [shape: f32[32,64], index: 4, kind: input, shape index: {}]
  %s5 = inlined_call_operand.vmem [shape: f32[1,64], index: 5, kind: input, shape index: {}]
  %s6 = inlined_call_operand.vmem [shape: f32[64,32], index: 6, kind: input, shape index: {}]
  %s7 = inlined_call_operand.vmem [shape: f32[1,32], index: 7, kind: input, shape index: {}]
  %s8 = inlined_call_operand.vmem [shape: f32[32,8], index: 8, kind: input, shape index: {}]
  %s9 = inlined_call_operand.vmem [shape: f32[1,8], index: 9, kind: input, shape index: {}]
  %s10 = inlined_call_operand.vmem [shape: f32[96,96], index: 10, kind: input, shape index: {}]
  %s11 = inlined_call_operand.vmem [shape: f32[96,96], index: 11, kind: input, shape index: {}]
  %s12 = inlined_call_operand.vmem [shape: f32[1,96], index: 12, kind: input, shape index: {}]
  %s13 = inlined_call_operand.vmem [shape: f32[96,64], index: 13, kind: input, shape index: {}]
  %s14 = inlined_call_operand.vmem [shape: f32[1,64], index: 14, kind: input, shape index: {}]
  %s15 = inlined_call_operand.vmem [shape: f32[64,32], index: 15, kind: input, shape index: {}]
  %s16 = inlined_call_operand.vmem [shape: f32[1,32], index: 16, kind: input, shape index: {}]
  %s17 = inlined_call_operand.vmem [shape: f32[96,384], index: 17, kind: input, shape index: {}]
  %s18 = inlined_call_operand.vmem [shape: f32[1,384], index: 18, kind: input, shape index: {}]
  %s19 = inlined_call_operand.vmem [shape: f32[384,192], index: 19, kind: input, shape index: {}]
  %s20 = inlined_call_operand.vmem [shape: f32[1,192], index: 20, kind: input, shape index: {}]
  %s21 = inlined_call_operand.vmem [shape: f32[96,2], index: 21, kind: input, shape index: {}]
  %s22 = inlined_call_operand.vmem [shape: f32[1,2], index: 22, kind: input, shape index: {}]
  %s23 = inlined_call_operand.vmem [shape: f32[32,96], index: 23, kind: input, shape index: {}]
  %s24 = inlined_call_operand.vmem [shape: f32[192,96], index: 24, kind: input, shape index: {}]
  %s25 = inlined_call_operand.vmem [shape: f32[1,96], index: 25, kind: input, shape index: {}]
  %s26 = inlined_call_operand.vmem [shape: f32[96,6], index: 26, kind: input, shape index: {}]
  %s27 = inlined_call_operand.vmem [shape: f32[1,6], index: 27, kind: input, shape index: {}]
  %s28 = inlined_call_operand.vmem [shape: f32[4,6], index: 28, kind: output, shape index: {}]
  %s29 = sld [smem:[#allocation0]]
  $region122: #{pepnet_forward.1} parent=0
    _
  %s31 = ssub.s32 1, %s29
  %s32 = scalar_select 0, %s31, %s29
  // Predicated region
  $region2: #{pepnet_forward.1} parent=0 // pred_check
    _
  $region3: #{pepnet_forward.1} parent=0 // pred_check_branch
    %34 = sbr.rel (0) target = $region5
  $region4: #{pepnet_forward.1} parent=0 // pred_region
    _
  $region5: #{pepnet_forward.1} parent=0 // pred_fallthru
    _
  // Predicated region
  $region6: #{pepnet_forward.1} parent=0 // pred_check
    _
  $region7: #{pepnet_forward.1} parent=0 // pred_check_branch
    %36 = sbr.rel (0) target = $region9
  $region8: #{pepnet_forward.1} parent=0 // pred_region
    _
  $region9: #{pepnet_forward.1} parent=0 // pred_fallthru
    _
  // Predicated region
  $region10: #{pepnet_forward.1} parent=0 // pred_check
    _
  $region11: #{pepnet_forward.1} parent=0 // pred_check_branch
    %38 = sbr.rel (0) target = $region13
  $region12: #{pepnet_forward.1} parent=0 // pred_region
    _
  $region13: #{pepnet_forward.1} parent=0 // pred_fallthru
    _
  // Predicated region
  $region14: #{pepnet_forward.1} parent=0 // pred_check
    _
  $region15: #{pepnet_forward.1} parent=0 // pred_check_branch
    %40 = sbr.rel (0) target = $region17
  $region16: #{pepnet_forward.1} parent=0 // pred_region
    _
  $region17: #{pepnet_forward.1} parent=0 // pred_fallthru
    _
  // Predicated region
  $region18: #{pepnet_forward.1} parent=0 // pred_check
    _
  $region19: #{pepnet_forward.1} parent=0 // pred_check_branch
    %42 = sbr.rel (0) target = $region21
  $region20: #{pepnet_forward.1} parent=0 // pred_region
    _
  $region21: #{pepnet_forward.1} parent=0 // pred_fallthru
    _
  // Predicated region
  $region22: #{pepnet_forward.1} parent=0 // pred_check
    _
  $region23: #{pepnet_forward.1} parent=0 // pred_check_branch
    %44 = sbr.rel (0) target = $region25
  $region24: #{pepnet_forward.1} parent=0 // pred_region
    _
  $region25: #{pepnet_forward.1} parent=0 // pred_fallthru
    _
  // Predicated region
  $region26: #{pepnet_forward.1} parent=0 // pred_check
    _
  $region27: #{pepnet_forward.1} parent=0 // pred_check_branch
    %46 = sbr.rel (0) target = $region29
  $region28: #{pepnet_forward.1} parent=0 // pred_region
    _
  $region29: #{pepnet_forward.1} parent=0 // pred_fallthru
    _
  // Predicated region
  $region30: #{pepnet_forward.1} parent=0 // pred_check
    _
  $region31: #{pepnet_forward.1} parent=0 // pred_check_branch
    %48 = sbr.rel (0) target = $region33
  $region32: #{pepnet_forward.1} parent=0 // pred_region
    _
  $region33: #{pepnet_forward.1} parent=0 // pred_fallthru
    _
  // Predicated region
  $region34: #{pepnet_forward.1} parent=0 // pred_check
    _
  $region35: #{pepnet_forward.1} parent=0 // pred_check_branch
    %50 = sbr.rel (0) target = $region37
  $region36: #{pepnet_forward.1} parent=0 // pred_region
    _
  $region37: #{pepnet_forward.1} parent=0 // pred_fallthru
    _
  // Predicated region
  $region38: #{pepnet_forward.1} parent=0 // pred_check
    _
  $region39: #{pepnet_forward.1} parent=0 // pred_check_branch
    %52 = sbr.rel (0) target = $region41
  $region40: #{pepnet_forward.1} parent=0 // pred_region
    _
  $region41: #{pepnet_forward.1} parent=0 // pred_fallthru
    _
  // Predicated region
  $region42: #{pepnet_forward.1} parent=0 // pred_check
    _
  $region43: #{pepnet_forward.1} parent=0 // pred_check_branch
    %54 = sbr.rel (0) target = $region45
  $region44: #{pepnet_forward.1} parent=0 // pred_region
    _
  $region45: #{pepnet_forward.1} parent=0 // pred_fallthru
    _
  // Predicated region
  $region46: #{pepnet_forward.1} parent=0 // pred_check
    _
  $region47: #{pepnet_forward.1} parent=0 // pred_check_branch
    %56 = sbr.rel (0) target = $region49
  $region48: #{pepnet_forward.1} parent=0 // pred_region
    _
  $region49: #{pepnet_forward.1} parent=0 // pred_fallthru
    _
  // Predicated region
  $region50: #{pepnet_forward.1} parent=0 // pred_check
    _
  $region51: #{pepnet_forward.1} parent=0 // pred_check_branch
    %58 = sbr.rel (0) target = $region53
  $region52: #{pepnet_forward.1} parent=0 // pred_region
    _
  $region53: #{pepnet_forward.1} parent=0 // pred_fallthru
    _
  // Predicated region
  $region54: #{pepnet_forward.1} parent=0 // pred_check
    _
  $region55: #{pepnet_forward.1} parent=0 // pred_check_branch
    %60 = sbr.rel (0) target = $region57
  $region56: #{pepnet_forward.1} parent=0 // pred_region
    _
  $region57: #{pepnet_forward.1} parent=0 // pred_fallthru
    _
  // Predicated region
  $region58: #{pepnet_forward.1} parent=0 // pred_check
    _
  $region59: #{pepnet_forward.1} parent=0 // pred_check_branch
    %62 = sbr.rel (0) target = $region61
  $region60: #{pepnet_forward.1} parent=0 // pred_region
    _
  $region61: #{pepnet_forward.1} parent=0 // pred_fallthru
    _
  // Predicated region
  $region62: #{pepnet_forward.1} parent=0 // pred_check
    _
  $region63: #{pepnet_forward.1} parent=0 // pred_check_branch
    %64 = sbr.rel (0) target = $region65
  $region64: #{pepnet_forward.1} parent=0 // pred_region
    _
  $region65: #{pepnet_forward.1} parent=0 // pred_fallthru
    _
  // Predicated region
  $region66: #{pepnet_forward.1} parent=0 // pred_check
    _
  $region67: #{pepnet_forward.1} parent=0 // pred_check_branch
    %66 = sbr.rel (0) target = $region69
  $region68: #{pepnet_forward.1} parent=0 // pred_region
    _
  $region69: #{pepnet_forward.1} parent=0 // pred_fallthru
    _
  // Predicated region
  $region70: #{pepnet_forward.1} parent=0 // pred_check
    _
  $region71: #{pepnet_forward.1} parent=0 // pred_check_branch
    %68 = sbr.rel (0) target = $region73
  $region72: #{pepnet_forward.1} parent=0 // pred_region
    _
  $region73: #{pepnet_forward.1} parent=0 // pred_fallthru
    _
  // Predicated region
  $region74: #{pepnet_forward.1} parent=0 // pred_check
    _
  $region75: #{pepnet_forward.1} parent=0 // pred_check_branch
    %70 = sbr.rel (0) target = $region77
  $region76: #{pepnet_forward.1} parent=0 // pred_region
    _
  $region77: #{pepnet_forward.1} parent=0 // pred_fallthru
    _
  // Predicated region
  $region78: #{pepnet_forward.1} parent=0 // pred_check
    _
  $region79: #{pepnet_forward.1} parent=0 // pred_check_branch
    %72 = sbr.rel (0) target = $region81
  $region80: #{pepnet_forward.1} parent=0 // pred_region
    _
  $region81: #{pepnet_forward.1} parent=0 // pred_fallthru
    _
  // Predicated region
  $region82: #{pepnet_forward.1} parent=0 // pred_check
    _
  $region83: #{pepnet_forward.1} parent=0 // pred_check_branch
    %74 = sbr.rel (0) target = $region85
  $region84: #{pepnet_forward.1} parent=0 // pred_region
    _
  $region85: #{pepnet_forward.1} parent=0 // pred_fallthru
    _
  // Predicated region
  $region86: #{pepnet_forward.1} parent=0 // pred_check
    _
  $region87: #{pepnet_forward.1} parent=0 // pred_check_branch
    %76 = sbr.rel (0) target = $region89
  $region88: #{pepnet_forward.1} parent=0 // pred_region
    _
  $region89: #{pepnet_forward.1} parent=0 // pred_fallthru
    _
  // Predicated region
  $region90: #{pepnet_forward.1} parent=0 // pred_check
    _
  $region91: #{pepnet_forward.1} parent=0 // pred_check_branch
    %78 = sbr.rel (0) target = $region93
  $region92: #{pepnet_forward.1} parent=0 // pred_region
    _
  $region93: #{pepnet_forward.1} parent=0 // pred_fallthru
    _
  // Predicated region
  $region94: #{pepnet_forward.1} parent=0 // pred_check
    _
  $region95: #{pepnet_forward.1} parent=0 // pred_check_branch
    %80 = sbr.rel (0) target = $region97
  $region96: #{pepnet_forward.1} parent=0 // pred_region
    _
  $region97: #{pepnet_forward.1} parent=0 // pred_fallthru
    _
  // Predicated region
  $region98: #{pepnet_forward.1} parent=0 // pred_check
    _
  $region99: #{pepnet_forward.1} parent=0 // pred_check_branch
    %82 = sbr.rel (0) target = $region101
  $region100: #{pepnet_forward.1} parent=0 // pred_region
    _
  $region101: #{pepnet_forward.1} parent=0 // pred_fallthru
    _
  // Predicated region
  $region102: #{pepnet_forward.1} parent=0 // pred_check
    _
  $region103: #{pepnet_forward.1} parent=0 // pred_check_branch
    %84 = sbr.rel (0) target = $region105
  $region104: #{pepnet_forward.1} parent=0 // pred_region
    _
  $region105: #{pepnet_forward.1} parent=0 // pred_fallthru
    _
  // Predicated region
  $region106: #{pepnet_forward.1} parent=0 // pred_check
    _
  $region107: #{pepnet_forward.1} parent=0 // pred_check_branch
    %86 = sbr.rel (0) target = $region109
  $region108: #{pepnet_forward.1} parent=0 // pred_region
    _
  $region109: #{pepnet_forward.1} parent=0 // pred_fallthru
    _
  // Predicated region
  $region110: #{pepnet_forward.1} parent=0 // pred_check
    _
  $region111: #{pepnet_forward.1} parent=0 // pred_check_branch
    %88 = sbr.rel (0) target = $region113
  $region112: #{pepnet_forward.1} parent=0 // pred_region
    _
  $region113: #{pepnet_forward.1} parent=0 // pred_fallthru
    _
  %v89 = vld [vmem:[%s0] sm:$0xf]
  %v90 = vld [vmem:[%s4] sm:$0xff]
  %v91 = vld [vmem:[%s4 + $0x8] sm:$0xff]
  %v92 = vld [vmem:[%s4 + $0x10] sm:$0xff]
  %v93 = vld [vmem:[%s4 + $0x18] sm:$0xff]
  %v94 = vld [vmem:[%s5] sm:$0x1]
  %v96 = vlaneseq
  %v97 = vshrl.u32 %v96, 7
  %v98 = vsub.s32 0, %v97
  %v99 = vrot.slane %v94, %v98
  %vm101 = vcmask 261120
  %v103 = vsel %vm101, %v89, 0
  %105 = vmatprep.subr.mxu0 0.0
  %106 = vmatpush1.msra.mxu0 %v90
  %107 = vmatprep.subr.mxu0 0.0
  %108 = vmatpush1.msra.mxu0 %v91
  %109 = vmatprep.subr.mxu0 0.0
  %110 = vmatpush1.msra.mxu0 %v92
  %111 = vmatprep.subr.mxu0 0.0
  %112 = vmatpush1.msra.mxu0 %v93
  %113 = vmatprep.subr.mxu0 0.0
  %114 = vmatpush1.msra.mxu0 0.0
  %115 = vmatprep.subr.mxu0 0.0
  %116 = vmatpush1.msra.mxu0 0.0
  %117 = vmatprep.subr.mxu0 0.0
  %118 = vmatpush1.msra.mxu0 0.0
  %119 = vmatprep.subr.mxu0 0.0
  %120 = vmatpush1.msra.mxu0 0.0
  %121 = vmatprep.subr.mxu0 0.0
  %122 = vmatpush1.msra.mxu0 0.0
  %123 = vmatprep.subr.mxu0 0.0
  %124 = vmatpush1.msra.mxu0 0.0
  %125 = vmatprep.subr.mxu0 0.0
  %126 = vmatpush1.msra.mxu0 0.0
  %127 = vmatprep.subr.mxu0 0.0
  %128 = vmatpush1.msra.mxu0 0.0
  %129 = vmatprep.subr.mxu0 0.0
  %130 = vmatpush1.msra.mxu0 0.0
  %131 = vmatprep.subr.mxu0 0.0
  %132 = vmatpush1.msra.mxu0 0.0
  %133 = vmatprep.subr.mxu0 0.0
  %134 = vmatpush1.msra.mxu0 0.0
  %135 = vmatprep.subr.mxu0 0.0
  %136 = vmatpush1.msra.mxu0 0.0
  %137 = vmatprep.subr.mxu0 0.0
  %138 = vmatpush1.msra.mxu0 0.0
  %139 = vmatprep.subr.mxu0 0.0
  %140 = vmatpush1.msra.mxu0 0.0
  %141 = vmatprep.subr.mxu0 0.0
  %142 = vmatpush1.msra.mxu0 0.0
  %143 = vmatprep.subr.mxu0 0.0
  %144 = vmatpush1.msra.mxu0 0.0
  %145 = vmatprep.subr.mxu0 0.0
  %146 = vmatpush1.msra.mxu0 0.0
  %147 = vmatprep.subr.mxu0 0.0
  %148 = vmatpush1.msra.mxu0 0.0
  %149 = vmatprep.subr.mxu0 0.0
  %150 = vmatpush1.msra.mxu0 0.0
  %151 = vmatprep.subr.mxu0 0.0
  %152 = vmatpush1.msra.mxu0 0.0
  %153 = vmatprep.subr.mxu0 0.0
  %154 = vmatpush1.msra.mxu0 0.0
  %155 = vmatprep.subr.mxu0 0.0
  %156 = vmatpush1.msra.mxu0 0.0
  %157 = vmatprep.subr.mxu0 0.0
  %158 = vmatpush1.msra.mxu0 0.0
  %159 = vmatprep.subr.mxu0 0.0
  %160 = vmatpush1.msra.mxu0 0.0
  %161 = vmatprep.subr.mxu0 0.0
  %162 = vmatpush1.msra.mxu0 0.0
  %163 = vmatprep.subr.mxu0 0.0
  %164 = vmatpush1.msra.mxu0 0.0
  %165 = vmatprep.subr.mxu0 0.0
  %166 = vmatpush1.msra.mxu0 0.0
  %167 = vmatprep.subr.mxu0 0.0
  %168 = vmatpush1.msra.mxu0 0.0
  %169 = vmatprep.mubr.f32.mxu0 0.0
  %170 = vmatmul.mubr.f32.gmra.mrb[0].mxu0 %v103
  %v171 = vpop.f32.mrb[0].mxu0
  %v172 = vadd.f32 %v99, %v171
  %v173 = vpop.f32.mrb[0].mxu0
  %174 = vdwg.mxu0
  %v175 = vld [vmem:[%s6] sm:$0xff]
  %v176 = vld [vmem:[%s6 + $0x8] sm:$0xff]
  %v177 = vld [vmem:[%s6 + $0x10] sm:$0xff]
  %v178 = vld [vmem:[%s6 + $0x18] sm:$0xff]
  %v179 = vld [vmem:[%s6 + $0x20] sm:$0xff]
  %v180 = vld [vmem:[%s6 + $0x28] sm:$0xff]
  %v181 = vld [vmem:[%s6 + $0x30] sm:$0xff]
  %v182 = vld [vmem:[%s6 + $0x38] sm:$0xff]
  %v183 = vld [vmem:[%s7] sm:$0x1]
  %v185 = vlaneseq
  %v186 = vshrl.u32 %v185, 7
  %v187 = vsub.s32 0, %v186
  %v188 = vrot.slane %v183, %v187
  %vm190 = vcmask 523264
  %v192 = vsel %vm190, %v172, 0
  %194 = vmatprep.subr.mxu0 0.0
  %195 = vmatpush1.msra.mxu0 %v175
  %196 = vmatprep.subr.mxu0 0.0
  %197 = vmatpush1.msra.mxu0 %v176
  %198 = vmatprep.subr.mxu0 0.0
  %199 = vmatpush1.msra.mxu0 %v177
  %200 = vmatprep.subr.mxu0 0.0
  %201 = vmatpush1.msra.mxu0 %v178
  %202 = vmatprep.subr.mxu0 0.0
  %203 = vmatpush1.msra.mxu0 %v179
  %204 = vmatprep.subr.mxu0 0.0
  %205 = vmatpush1.msra.mxu0 %v180
  %206 = vmatprep.subr.mxu0 0.0
  %207 = vmatpush1.msra.mxu0 %v181
  %208 = vmatprep.subr.mxu0 0.0
  %209 = vmatpush1.msra.mxu0 %v182
  %210 = vmatprep.subr.mxu0 0.0
  %211 = vmatpush1.msra.mxu0 0.0
  %212 = vmatprep.subr.mxu0 0.0
  %213 = vmatpush1.msra.mxu0 0.0
  %214 = vmatprep.subr.mxu0 0.0
  %215 = vmatpush1.msra.mxu0 0.0
  %216 = vmatprep.subr.mxu0 0.0
  %217 = vmatpush1.msra.mxu0 0.0
  %218 = vmatprep.subr.mxu0 0.0
  %219 = vmatpush1.msra.mxu0 0.0
  %220 = vmatprep.subr.mxu0 0.0
  %221 = vmatpush1.msra.mxu0 0.0
  %222 = vmatprep.subr.mxu0 0.0
  %223 = vmatpush1.msra.mxu0 0.0
  %224 = vmatprep.subr.mxu0 0.0
  %225 = vmatpush1.msra.mxu0 0.0
  %226 = vmatprep.subr.mxu0 0.0
  %227 = vmatpush1.msra.mxu0 0.0
  %228 = vmatprep.subr.mxu0 0.0
  %229 = vmatpush1.msra.mxu0 0.0
  %230 = vmatprep.subr.mxu0 0.0
  %231 = vmatpush1.msra.mxu0 0.0
  %232 = vmatprep.subr.mxu0 0.0
  %233 = vmatpush1.msra.mxu0 0.0
  %234 = vmatprep.subr.mxu0 0.0
  %235 = vmatpush1.msra.mxu0 0.0
  %236 = vmatprep.subr.mxu0 0.0
  %237 = vmatpush1.msra.mxu0 0.0
  %238 = vmatprep.subr.mxu0 0.0
  %239 = vmatpush1.msra.mxu0 0.0
  %240 = vmatprep.subr.mxu0 0.0
  %241 = vmatpush1.msra.mxu0 0.0
  %242 = vmatprep.subr.mxu0 0.0
  %243 = vmatpush1.msra.mxu0 0.0
  %244 = vmatprep.subr.mxu0 0.0
  %245 = vmatpush1.msra.mxu0 0.0
  %246 = vmatprep.subr.mxu0 0.0
  %247 = vmatpush1.msra.mxu0 0.0
  %248 = vmatprep.subr.mxu0 0.0
  %249 = vmatpush1.msra.mxu0 0.0
  %250 = vmatprep.subr.mxu0 0.0
  %251 = vmatpush1.msra.mxu0 0.0
  %252 = vmatprep.subr.mxu0 0.0
  %253 = vmatpush1.msra.mxu0 0.0
  %254 = vmatprep.subr.mxu0 0.0
  %255 = vmatpush1.msra.mxu0 0.0
  %256 = vmatprep.subr.mxu0 0.0
  %257 = vmatpush1.msra.mxu0 0.0
  %258 = vmatprep.mubr.f32.mxu0 0.0
  %259 = vmatmul.mubr.f32.gmra.mrb[0].mxu0 %v192
  %v260 = vpop.f32.mrb[0].mxu0
  %v261 = vadd.f32 %v188, %v260
  %v262 = vpop.f32.mrb[0].mxu0
  %263 = vdwg.mxu0
  %v264 = vld [vmem:[%s8] sm:$0xff]
  %v265 = vld [vmem:[%s8 + $0x8] sm:$0xff]
  %v266 = vld [vmem:[%s8 + $0x10] sm:$0xff]
  %v267 = vld [vmem:[%s8 + $0x18] sm:$0xff]
  %v268 = vld [vmem:[%s9] sm:$0x1]
  %v270 = vlaneseq
  %v271 = vshrl.u32 %v270, 7
  %v272 = vsub.s32 0, %v271
  %v273 = vrot.slane %v268, %v272
  %v276 = vsel %vm101, %v261, 0
  %278 = vmatprep.subr.mxu0 0.0
  %279 = vmatpush1.msra.mxu0 %v264
  %280 = vmatprep.subr.mxu0 0.0
  %281 = vmatpush1.msra.mxu0 %v265
  %282 = vmatprep.subr.mxu0 0.0
  %283 = vmatpush1.msra.mxu0 %v266
  %284 = vmatprep.subr.mxu0 0.0
  %285 = vmatpush1.msra.mxu0 %v267
  %286 = vmatprep.subr.mxu0 0.0
  %287 = vmatpush1.msra.mxu0 0.0
  %288 = vmatprep.subr.mxu0 0.0
  %289 = vmatpush1.msra.mxu0 0.0
  %290 = vmatprep.subr.mxu0 0.0
  %291 = vmatpush1.msra.mxu0 0.0
  %292 = vmatprep.subr.mxu0 0.0
  %293 = vmatpush1.msra.mxu0 0.0
  %294 = vmatprep.subr.mxu0 0.0
  %295 = vmatpush1.msra.mxu0 0.0
  %296 = vmatprep.subr.mxu0 0.0
  %297 = vmatpush1.msra.mxu0 0.0
  %298 = vmatprep.subr.mxu0 0.0
  %299 = vmatpush1.msra.mxu0 0.0
  %300 = vmatprep.subr.mxu0 0.0
  %301 = vmatpush1.msra.mxu0 0.0
  %302 = vmatprep.subr.mxu0 0.0
  %303 = vmatpush1.msra.mxu0 0.0
  %304 = vmatprep.subr.mxu0 0.0
  %305 = vmatpush1.msra.mxu0 0.0
  %306 = vmatprep.subr.mxu0 0.0
  %307 = vmatpush1.msra.mxu0 0.0
  %308 = vmatprep.subr.mxu0 0.0
  %309 = vmatpush1.msra.mxu0 0.0
  %310 = vmatprep.subr.mxu0 0.0
  %311 = vmatpush1.msra.mxu0 0.0
  %312 = vmatprep.subr.mxu0 0.0
  %313 = vmatpush1.msra.mxu0 0.0
  %314 = vmatprep.subr.mxu0 0.0
  %315 = vmatpush1.msra.mxu0 0.0
  %316 = vmatprep.subr.mxu0 0.0
  %317 = vmatpush1.msra.mxu0 0.0
  %318 = vmatprep.subr.mxu0 0.0
  %319 = vmatpush1.msra.mxu0 0.0
  %320 = vmatprep.subr.mxu0 0.0
  %321 = vmatpush1.msra.mxu0 0.0
  %322 = vmatprep.subr.mxu0 0.0
  %323 = vmatpush1.msra.mxu0 0.0
  %324 = vmatprep.subr.mxu0 0.0
  %325 = vmatpush1.msra.mxu0 0.0
  %326 = vmatprep.subr.mxu0 0.0
  %327 = vmatpush1.msra.mxu0 0.0
  %328 = vmatprep.subr.mxu0 0.0
  %329 = vmatpush1.msra.mxu0 0.0
  %330 = vmatprep.subr.mxu0 0.0
  %331 = vmatpush1.msra.mxu0 0.0
  %332 = vmatprep.subr.mxu0 0.0
  %333 = vmatpush1.msra.mxu0 0.0
  %334 = vmatprep.subr.mxu0 0.0
  %335 = vmatpush1.msra.mxu0 0.0
  %336 = vmatprep.subr.mxu0 0.0
  %337 = vmatpush1.msra.mxu0 0.0
  %338 = vmatprep.subr.mxu0 0.0
  %339 = vmatpush1.msra.mxu0 0.0
  %340 = vmatprep.subr.mxu0 0.0
  %341 = vmatpush1.msra.mxu0 0.0
  %342 = vmatprep.mubr.f32.mxu0 0.0
  %343 = vmatmul.mubr.f32.gmra.mrb[0].mxu0 %v276
  %v344 = vpop.f32.mrb[0].mxu0
  %v345 = vadd.f32 %v273, %v344
  %v346 = vpop.f32.mrb[0].mxu0
  %347 = vdwg.mxu0
  %v348 = vxor.u32 %v345, 2147483648
  %v349 = vmul.f32 %v348, 1.442695
  %v350 = vpow.pop %v349
  %v351 = vadd.f32 %v350, 1.0
  %v352 = vrcp.pop %v351
  %v353 = vmul.f32 1.0, %v352
  %v354 = vmul.f32 %v353, 2.0
  %v355 = vld [vmem:[%s3] sm:$0xff]
  %vm356 = vcmask 64512
  %v358 = vsel %vm356, %v354, 0
  %360 = vmatprep.subr.mxu0 0.0
  %361 = vmatpush1.msra.mxu0 %v355
  %362 = vmatprep.subr.mxu0 0.0
  %363 = vmatpush1.msra.mxu0 0.0
  %364 = vmatprep.subr.mxu0 0.0
  %365 = vmatpush1.msra.mxu0 0.0
  %366 = vmatprep.subr.mxu0 0.0
  %367 = vmatpush1.msra.mxu0 0.0
  %368 = vmatprep.subr.mxu0 0.0
  %369 = vmatpush1.msra.mxu0 0.0
  %370 = vmatprep.subr.mxu0 0.0
  %371 = vmatpush1.msra.mxu0 0.0
  %372 = vmatprep.subr.mxu0 0.0
  %373 = vmatpush1.msra.mxu0 0.0
  %374 = vmatprep.subr.mxu0 0.0
  %375 = vmatpush1.msra.mxu0 0.0
  %376 = vmatprep.subr.mxu0 0.0
  %377 = vmatpush1.msra.mxu0 0.0
  %378 = vmatprep.subr.mxu0 0.0
  %379 = vmatpush1.msra.mxu0 0.0
  %380 = vmatprep.subr.mxu0 0.0
  %381 = vmatpush1.msra.mxu0 0.0
  %382 = vmatprep.subr.mxu0 0.0
  %383 = vmatpush1.msra.mxu0 0.0
  %384 = vmatprep.subr.mxu0 0.0
  %385 = vmatpush1.msra.mxu0 0.0
  %386 = vmatprep.subr.mxu0 0.0
  %387 = vmatpush1.msra.mxu0 0.0
  %388 = vmatprep.subr.mxu0 0.0
  %389 = vmatpush1.msra.mxu0 0.0
  %390 = vmatprep.subr.mxu0 0.0
  %391 = vmatpush1.msra.mxu0 0.0
  %392 = vmatprep.subr.mxu0 0.0
  %393 = vmatpush1.msra.mxu0 0.0
  %394 = vmatprep.subr.mxu0 0.0
  %395 = vmatpush1.msra.mxu0 0.0
  %396 = vmatprep.subr.mxu0 0.0
  %397 = vmatpush1.msra.mxu0 0.0
  %398 = vmatprep.subr.mxu0 0.0
  %399 = vmatpush1.msra.mxu0 0.0
  %400 = vmatprep.subr.mxu0 0.0
  %401 = vmatpush1.msra.mxu0 0.0
  %402 = vmatprep.subr.mxu0 0.0
  %403 = vmatpush1.msra.mxu0 0.0
  %404 = vmatprep.subr.mxu0 0.0
  %405 = vmatpush1.msra.mxu0 0.0
  %406 = vmatprep.subr.mxu0 0.0
  %407 = vmatpush1.msra.mxu0 0.0
  %408 = vmatprep.subr.mxu0 0.0
  %409 = vmatpush1.msra.mxu0 0.0
  %410 = vmatprep.subr.mxu0 0.0
  %411 = vmatpush1.msra.mxu0 0.0
  %412 = vmatprep.subr.mxu0 0.0
  %413 = vmatpush1.msra.mxu0 0.0
  %414 = vmatprep.subr.mxu0 0.0
  %415 = vmatpush1.msra.mxu0 0.0
  %416 = vmatprep.subr.mxu0 0.0
  %417 = vmatpush1.msra.mxu0 0.0
  %418 = vmatprep.subr.mxu0 0.0
  %419 = vmatpush1.msra.mxu0 0.0
  %420 = vmatprep.subr.mxu0 0.0
  %421 = vmatpush1.msra.mxu0 0.0
  %422 = vmatprep.subr.mxu0 0.0
  %423 = vmatpush1.msra.mxu0 0.0
  %424 = vmatprep.mubr.f32.mxu0 0.0
  %425 = vmatmul.mubr.f32.gmra.mrb[0].mxu0 %v358
  %v426 = vpop.f32.mrb[0].mxu0
  %v427 = vadd.f32 0.0, %v426
  %v428 = vpop.f32.mrb[0].mxu0
  %429 = vdwg.mxu0
  %v430 = vld [vmem:[%s1] sm:$0xf]
  %v431 = vmul.f32 %v430, %v427
  %v432 = vld [vmem:[%s10] sm:$0xff]
  %v433 = vld [vmem:[%s10 + $0x8] sm:$0xff]
  %v434 = vld [vmem:[%s10 + $0x10] sm:$0xff]
  %v435 = vld [vmem:[%s10 + $0x18] sm:$0xff]
  %v436 = vld [vmem:[%s10 + $0x20] sm:$0xff]
  %v437 = vld [vmem:[%s10 + $0x28] sm:$0xff]
  %v438 = vld [vmem:[%s10 + $0x30] sm:$0xff]
  %v439 = vld [vmem:[%s10 + $0x38] sm:$0xff]
  %v440 = vld [vmem:[%s10 + $0x40] sm:$0xff]
  %v441 = vld [vmem:[%s10 + $0x48] sm:$0xff]
  %v442 = vld [vmem:[%s10 + $0x50] sm:$0xff]
  %v443 = vld [vmem:[%s10 + $0x58] sm:$0xff]
  %v444 = vld [vmem:[%s2] sm:$0xf]
  %v445 = vld [vmem:[%s11] sm:$0xff]
  %v446 = vld [vmem:[%s11 + $0x8] sm:$0xff]
  %v447 = vld [vmem:[%s11 + $0x10] sm:$0xff]
  %v448 = vld [vmem:[%s11 + $0x18] sm:$0xff]
  %v449 = vld [vmem:[%s11 + $0x20] sm:$0xff]
  %v450 = vld [vmem:[%s11 + $0x28] sm:$0xff]
  %v451 = vld [vmem:[%s11 + $0x30] sm:$0xff]
  %v452 = vld [vmem:[%s11 + $0x38] sm:$0xff]
  %v453 = vld [vmem:[%s11 + $0x40] sm:$0xff]
  %v454 = vld [vmem:[%s11 + $0x48] sm:$0xff]
  %v455 = vld [vmem:[%s11 + $0x50] sm:$0xff]
  %v456 = vld [vmem:[%s11 + $0x58] sm:$0xff]
  %vm457 = vcmask 785408
  %v459 = vsel %vm457, %v444, 0
  %461 = vmatprep.subr.mxu0 0.0
  %462 = vmatpush1.msra.mxu0 %v445
  %463 = vmatprep.subr.mxu0 0.0
  %464 = vmatpush1.msra.mxu0 %v446
  %465 = vmatprep.subr.mxu0 0.0
  %466 = vmatpush1.msra.mxu0 %v447
  %467 = vmatprep.subr.mxu0 0.0
  %468 = vmatpush1.msra.mxu0 %v448
  %469 = vmatprep.subr.mxu0 0.0
  %470 = vmatpush1.msra.mxu0 %v449
  %471 = vmatprep.subr.mxu0 0.0
  %472 = vmatpush1.msra.mxu0 %v450
  %473 = vmatprep.subr.mxu0 0.0
  %474 = vmatpush1.msra.mxu0 %v451
  %475 = vmatprep.subr.mxu0 0.0
  %476 = vmatpush1.msra.mxu0 %v452
  %477 = vmatprep.subr.mxu0 0.0
  %478 = vmatpush1.msra.mxu0 %v453
  %479 = vmatprep.subr.mxu0 0.0
  %480 = vmatpush1.msra.mxu0 %v454
  %481 = vmatprep.subr.mxu0 0.0
  %482 = vmatpush1.msra.mxu0 %v455
  %483 = vmatprep.subr.mxu0 0.0
  %484 = vmatpush1.msra.mxu0 %v456
  %485 = vmatprep.subr.mxu0 0.0
  %486 = vmatpush1.msra.mxu0 0.0
  %487 = vmatprep.subr.mxu0 0.0
  %488 = vmatpush1.msra.mxu0 0.0
  %489 = vmatprep.subr.mxu0 0.0
  %490 = vmatpush1.msra.mxu0 0.0
  %491 = vmatprep.subr.mxu0 0.0
  %492 = vmatpush1.msra.mxu0 0.0
  %493 = vmatprep.subr.mxu0 0.0
  %494 = vmatpush1.msra.mxu0 0.0
  %495 = vmatprep.subr.mxu0 0.0
  %496 = vmatpush1.msra.mxu0 0.0
  %497 = vmatprep.subr.mxu0 0.0
  %498 = vmatpush1.msra.mxu0 0.0
  %499 = vmatprep.subr.mxu0 0.0
  %500 = vmatpush1.msra.mxu0 0.0
  %501 = vmatprep.subr.mxu0 0.0
  %502 = vmatpush1.msra.mxu0 0.0
  %503 = vmatprep.subr.mxu0 0.0
  %504 = vmatpush1.msra.mxu0 0.0
  %505 = vmatprep.subr.mxu0 0.0
  %506 = vmatpush1.msra.mxu0 0.0
  %507 = vmatprep.subr.mxu0 0.0
  %508 = vmatpush1.msra.mxu0 0.0
  %509 = vmatprep.subr.mxu0 0.0
  %510 = vmatpush1.msra.mxu0 0.0
  %511 = vmatprep.subr.mxu0 0.0
  %512 = vmatpush1.msra.mxu0 0.0
  %513 = vmatprep.subr.mxu0 0.0
  %514 = vmatpush1.msra.mxu0 0.0
  %515 = vmatprep.subr.mxu0 0.0
  %516 = vmatpush1.msra.mxu0 0.0
  %517 = vmatprep.subr.mxu0 0.0
  %518 = vmatpush1.msra.mxu0 0.0
  %519 = vmatprep.subr.mxu0 0.0
  %520 = vmatpush1.msra.mxu0 0.0
  %521 = vmatprep.subr.mxu0 0.0
  %522 = vmatpush1.msra.mxu0 0.0
  %523 = vmatprep.subr.mxu0 0.0
  %524 = vmatpush1.msra.mxu0 0.0
  %525 = vmatprep.mubr.f32.mxu0 0.0
  %526 = vmatmul.mubr.f32.gmra.mrb[0].mxu0 %v459
  %v527 = vpop.f32.mrb[0].mxu0
  %v528 = vadd.f32 0.0, %v527
  %v529 = vpop.f32.mrb[0].mxu0
  %530 = vdwg.mxu0
  %v532 = vsel %vm457, %v431, 0
  %534 = vmatprep.subr.mxu0 0.0
  %535 = vmatpush1.msra.mxu0 %v432
  %536 = vmatprep.subr.mxu0 0.0
  %537 = vmatpush1.msra.mxu0 %v433
  %538 = vmatprep.subr.mxu0 0.0
  %539 = vmatpush1.msra.mxu0 %v434
  %540 = vmatprep.subr.mxu0 0.0
  %541 = vmatpush1.msra.mxu0 %v435
  %542 = vmatprep.subr.mxu0 0.0
  %543 = vmatpush1.msra.mxu0 %v436
  %544 = vmatprep.subr.mxu0 0.0
  %545 = vmatpush1.msra.mxu0 %v437
  %546 = vmatprep.subr.mxu0 0.0
  %547 = vmatpush1.msra.mxu0 %v438
  %548 = vmatprep.subr.mxu0 0.0
  %549 = vmatpush1.msra.mxu0 %v439
  %550 = vmatprep.subr.mxu0 0.0
  %551 = vmatpush1.msra.mxu0 %v440
  %552 = vmatprep.subr.mxu0 0.0
  %553 = vmatpush1.msra.mxu0 %v441
  %554 = vmatprep.subr.mxu0 0.0
  %555 = vmatpush1.msra.mxu0 %v442
  %556 = vmatprep.subr.mxu0 0.0
  %557 = vmatpush1.msra.mxu0 %v443
  %558 = vmatprep.subr.mxu0 0.0
  %559 = vmatpush1.msra.mxu0 0.0
  %560 = vmatprep.subr.mxu0 0.0
  %561 = vmatpush1.msra.mxu0 0.0
  %562 = vmatprep.subr.mxu0 0.0
  %563 = vmatpush1.msra.mxu0 0.0
  %564 = vmatprep.subr.mxu0 0.0
  %565 = vmatpush1.msra.mxu0 0.0
  %566 = vmatprep.subr.mxu0 0.0
  %567 = vmatpush1.msra.mxu0 0.0
  %568 = vmatprep.subr.mxu0 0.0
  %569 = vmatpush1.msra.mxu0 0.0
  %570 = vmatprep.subr.mxu0 0.0
  %571 = vmatpush1.msra.mxu0 0.0
  %572 = vmatprep.subr.mxu0 0.0
  %573 = vmatpush1.msra.mxu0 0.0
  %574 = vmatprep.subr.mxu0 0.0
  %575 = vmatpush1.msra.mxu0 0.0
  %576 = vmatprep.subr.mxu0 0.0
  %577 = vmatpush1.msra.mxu0 0.0
  %578 = vmatprep.subr.mxu0 0.0
  %579 = vmatpush1.msra.mxu0 0.0
  %580 = vmatprep.subr.mxu0 0.0
  %581 = vmatpush1.msra.mxu0 0.0
  %582 = vmatprep.subr.mxu0 0.0
  %583 = vmatpush1.msra.mxu0 0.0
  %584 = vmatprep.subr.mxu0 0.0
  %585 = vmatpush1.msra.mxu0 0.0
  %586 = vmatprep.subr.mxu0 0.0
  %587 = vmatpush1.msra.mxu0 0.0
  %588 = vmatprep.subr.mxu0 0.0
  %589 = vmatpush1.msra.mxu0 0.0
  %590 = vmatprep.subr.mxu0 0.0
  %591 = vmatpush1.msra.mxu0 0.0
  %592 = vmatprep.subr.mxu0 0.0
  %593 = vmatpush1.msra.mxu0 0.0
  %594 = vmatprep.subr.mxu0 0.0
  %595 = vmatpush1.msra.mxu0 0.0
  %596 = vmatprep.subr.mxu0 0.0
  %597 = vmatpush1.msra.mxu0 0.0
  %598 = vmatprep.mubr.f32.mxu0 0.0
  %599 = vmatmul.mubr.f32.gmra.mrb[0].mxu0 %v532
  %v600 = vpop.f32.mrb[0].mxu0
  %v601 = vadd.f32 %v528, %v600
  %v602 = vpop.f32.mrb[0].mxu0
  %603 = vdwg.mxu0
  %v604 = vld [vmem:[%s12] sm:$0x1]
  %v606 = vlaneseq
  %v607 = vshrl.u32 %v606, 7
  %v608 = vsub.s32 0, %v607
  %v609 = vrot.slane %v604, %v608
  %v611 = vadd.f32 %v601, %v609
  %v612 = vmax.f32 %v611, 0.0
  %v613 = vxor.u32 %v612, 2147483648
  %v614 = vmul.f32 %v613, 1.442695
  %v615 = vpow.pop %v614
  %v616 = vadd.f32 %v615, 1.0
  %v617 = vrcp.pop %v616
  %v618 = vmul.f32 1.0, %v617
  %v619 = vmul.f32 %v618, 2.0
  %v620 = vld [vmem:[%s13] sm:$0xff]
  %v621 = vld [vmem:[%s13 + $0x8] sm:$0xff]
  %v622 = vld [vmem:[%s13 + $0x10] sm:$0xff]
  %v623 = vld [vmem:[%s13 + $0x18] sm:$0xff]
  %v624 = vld [vmem:[%s13 + $0x20] sm:$0xff]
  %v625 = vld [vmem:[%s13 + $0x28] sm:$0xff]
  %v626 = vld [vmem:[%s13 + $0x30] sm:$0xff]
  %v627 = vld [vmem:[%s13 + $0x38] sm:$0xff]
  %v628 = vld [vmem:[%s13 + $0x40] sm:$0xff]
  %v629 = vld [vmem:[%s13 + $0x48] sm:$0xff]
  %v630 = vld [vmem:[%s13 + $0x50] sm:$0xff]
  %v631 = vld [vmem:[%s13 + $0x58] sm:$0xff]
  %v632 = vld [vmem:[%s14] sm:$0x1]
  %v634 = vlaneseq
  %v635 = vshrl.u32 %v634, 7
  %v636 = vsub.s32 0, %v635
  %v637 = vrot.slane %v632, %v636
  %639 = vmatprep.subr.mxu0 0.0
  %640 = vmatpush1.msra.mxu0 %v620
  %641 = vmatprep.subr.mxu0 0.0
  %642 = vmatpush1.msra.mxu0 %v621
  %643 = vmatprep.subr.mxu0 0.0
  %644 = vmatpush1.msra.mxu0 %v622
  %645 = vmatprep.subr.mxu0 0.0
  %646 = vmatpush1.msra.mxu0 %v623
  %647 = vmatprep.subr.mxu0 0.0
  %648 = vmatpush1.msra.mxu0 %v624
  %649 = vmatprep.subr.mxu0 0.0
  %650 = vmatpush1.msra.mxu0 %v625
  %651 = vmatprep.subr.mxu0 0.0
  %652 = vmatpush1.msra.mxu0 %v626
  %653 = vmatprep.subr.mxu0 0.0
  %654 = vmatpush1.msra.mxu0 %v627
  %655 = vmatprep.subr.mxu0 0.0
  %656 = vmatpush1.msra.mxu0 %v628
  %657 = vmatprep.subr.mxu0 0.0
  %658 = vmatpush1.msra.mxu0 %v629
  %659 = vmatprep.subr.mxu0 0.0
  %660 = vmatpush1.msra.mxu0 %v630
  %661 = vmatprep.subr.mxu0 0.0
  %662 = vmatpush1.msra.mxu0 %v631
  %663 = vmatprep.subr.mxu0 0.0
  %664 = vmatpush1.msra.mxu0 0.0
  %665 = vmatprep.subr.mxu0 0.0
  %666 = vmatpush1.msra.mxu0 0.0
  %667 = vmatprep.subr.mxu0 0.0
  %668 = vmatpush1.msra.mxu0 0.0
  %669 = vmatprep.subr.mxu0 0.0
  %670 = vmatpush1.msra.mxu0 0.0
  %671 = vmatprep.subr.mxu0 0.0
  %672 = vmatpush1.msra.mxu0 0.0
  %673 = vmatprep.subr.mxu0 0.0
  %674 = vmatpush1.msra.mxu0 0.0
  %675 = vmatprep.subr.mxu0 0.0
  %676 = vmatpush1.msra.mxu0 0.0
  %677 = vmatprep.subr.mxu0 0.0
  %678 = vmatpush1.msra.mxu0 0.0
  %679 = vmatprep.subr.mxu0 0.0
  %680 = vmatpush1.msra.mxu0 0.0
  %681 = vmatprep.subr.mxu0 0.0
  %682 = vmatpush1.msra.mxu0 0.0
  %683 = vmatprep.subr.mxu0 0.0
  %684 = vmatpush1.msra.mxu0 0.0
  %685 = vmatprep.subr.mxu0 0.0
  %686 = vmatpush1.msra.mxu0 0.0
  %687 = vmatprep.subr.mxu0 0.0
  %688 = vmatpush1.msra.mxu0 0.0
  %689 = vmatprep.subr.mxu0 0.0
  %690 = vmatpush1.msra.mxu0 0.0
  %691 = vmatprep.subr.mxu0 0.0
  %692 = vmatpush1.msra.mxu0 0.0
  %693 = vmatprep.subr.mxu0 0.0
  %694 = vmatpush1.msra.mxu0 0.0
  %695 = vmatprep.subr.mxu0 0.0
  %696 = vmatpush1.msra.mxu0 0.0
  %697 = vmatprep.subr.mxu0 0.0
  %698 = vmatpush1.msra.mxu0 0.0
  %699 = vmatprep.subr.mxu0 0.0
  %700 = vmatpush1.msra.mxu0 0.0
  %701 = vmatprep.subr.mxu0 0.0
  %702 = vmatpush1.msra.mxu0 0.0
  %703 = vmatprep.mubr.f32.mxu0 0.0
  %704 = vmatmul.mubr.f32.gmra.mrb[0].mxu0 %v532
  %v705 = vpop.f32.mrb[0].mxu0
  %v706 = vadd.f32 %v637, %v705
  %v707 = vpop.f32.mrb[0].mxu0
  %708 = vdwg.mxu0
  %v709 = vmul.f32 %v706, %v619
  %v710 = vld [vmem:[%s15] sm:$0xff]
  %v711 = vld [vmem:[%s15 + $0x8] sm:$0xff]
  %v712 = vld [vmem:[%s15 + $0x10] sm:$0xff]
  %v713 = vld [vmem:[%s15 + $0x18] sm:$0xff]
  %v714 = vld [vmem:[%s15 + $0x20] sm:$0xff]
  %v715 = vld [vmem:[%s15 + $0x28] sm:$0xff]
  %v716 = vld [vmem:[%s15 + $0x30] sm:$0xff]
  %v717 = vld [vmem:[%s15 + $0x38] sm:$0xff]
  %v718 = vld [vmem:[%s16] sm:$0x1]
  %v720 = vlaneseq
  %v721 = vshrl.u32 %v720, 7
  %v722 = vsub.s32 0, %v721
  %v723 = vrot.slane %v718, %v722
  %v726 = vsel %vm190, %v709, 0
  %728 = vmatprep.subr.mxu0 0.0
  %729 = vmatpush1.msra.mxu0 %v710
  %730 = vmatprep.subr.mxu0 0.0
  %731 = vmatpush1.msra.mxu0 %v711
  %732 = vmatprep.subr.mxu0 0.0
  %733 = vmatpush1.msra.mxu0 %v712
  %734 = vmatprep.subr.mxu0 0.0
  %735 = vmatpush1.msra.mxu0 %v713
  %736 = vmatprep.subr.mxu0 0.0
  %737 = vmatpush1.msra.mxu0 %v714
  %738 = vmatprep.subr.mxu0 0.0
  %739 = vmatpush1.msra.mxu0 %v715
  %740 = vmatprep.subr.mxu0 0.0
  %741 = vmatpush1.msra.mxu0 %v716
  %742 = vmatprep.subr.mxu0 0.0
  %743 = vmatpush1.msra.mxu0 %v717
  %744 = vmatprep.subr.mxu0 0.0
  %745 = vmatpush1.msra.mxu0 0.0
  %746 = vmatprep.subr.mxu0 0.0
  %747 = vmatpush1.msra.mxu0 0.0
  %748 = vmatprep.subr.mxu0 0.0
  %749 = vmatpush1.msra.mxu0 0.0
  %750 = vmatprep.subr.mxu0 0.0
  %751 = vmatpush1.msra.mxu0 0.0
  %752 = vmatprep.subr.mxu0 0.0
  %753 = vmatpush1.msra.mxu0 0.0
  %754 = vmatprep.subr.mxu0 0.0
  %755 = vmatpush1.msra.mxu0 0.0
  %756 = vmatprep.subr.mxu0 0.0
  %757 = vmatpush1.msra.mxu0 0.0
  %758 = vmatprep.subr.mxu0 0.0
  %759 = vmatpush1.msra.mxu0 0.0
  %760 = vmatprep.subr.mxu0 0.0
  %761 = vmatpush1.msra.mxu0 0.0
  %762 = vmatprep.subr.mxu0 0.0
  %763 = vmatpush1.msra.mxu0 0.0
  %764 = vmatprep.subr.mxu0 0.0
  %765 = vmatpush1.msra.mxu0 0.0
  %766 = vmatprep.subr.mxu0 0.0
  %767 = vmatpush1.msra.mxu0 0.0
  %768 = vmatprep.subr.mxu0 0.0
  %769 = vmatpush1.msra.mxu0 0.0
  %770 = vmatprep.subr.mxu0 0.0
  %771 = vmatpush1.msra.mxu0 0.0
  %772 = vmatprep.subr.mxu0 0.0
  %773 = vmatpush1.msra.mxu0 0.0
  %774 = vmatprep.subr.mxu0 0.0
  %775 = vmatpush1.msra.mxu0 0.0
  %776 = vmatprep.subr.mxu0 0.0
  %777 = vmatpush1.msra.mxu0 0.0
  %778 = vmatprep.subr.mxu0 0.0
  %779 = vmatpush1.msra.mxu0 0.0
  %780 = vmatprep.subr.mxu0 0.0
  %781 = vmatpush1.msra.mxu0 0.0
  %782 = vmatprep.subr.mxu0 0.0
  %783 = vmatpush1.msra.mxu0 0.0
  %784 = vmatprep.subr.mxu0 0.0
  %785 = vmatpush1.msra.mxu0 0.0
  %786 = vmatprep.subr.mxu0 0.0
  %787 = vmatpush1.msra.mxu0 0.0
  %788 = vmatprep.subr.mxu0 0.0
  %789 = vmatpush1.msra.mxu0 0.0
  %790 = vmatprep.subr.mxu0 0.0
  %791 = vmatpush1.msra.mxu0 0.0
  %792 = vmatprep.mubr.f32.mxu0 0.0
  %793 = vmatmul.mubr.f32.gmra.mrb[0].mxu0 %v726
  %v794 = vpop.f32.mrb[0].mxu0
  %v795 = vadd.f32 %v723, %v794
  %v796 = vpop.f32.mrb[0].mxu0
  %797 = vdwg.mxu0
  %799 = vrot.lane.b32.xlu0 %v619, 64
  %v800 = vpop.permute.xlu0 %799
  %v802 = vmul.f32 %v795, %v800
  %v803 = vld [vmem:[%s17] sm:$0xff]
  %v804 = vld [vmem:[%s17 + $0x8] sm:$0xff]
  %v805 = vld [vmem:[%s17 + $0x10] sm:$0xff]
  %v806 = vld [vmem:[%s17 + $0x18] sm:$0xff]
  %v807 = vld [vmem:[%s17 + $0x20] sm:$0xff]
  %v808 = vld [vmem:[%s17 + $0x28] sm:$0xff]
  %v809 = vld [vmem:[%s17 + $0x30] sm:$0xff]
  %v810 = vld [vmem:[%s17 + $0x38] sm:$0xff]
  %v811 = vld [vmem:[%s17 + $0x40] sm:$0xff]
  %v812 = vld [vmem:[%s17 + $0x48] sm:$0xff]
  %v813 = vld [vmem:[%s17 + $0x50] sm:$0xff]
  %v814 = vld [vmem:[%s17 + $0x58] sm:$0xff]
  %v815 = vld [vmem:[%s17 + $0x60] sm:$0xff]
  %v816 = vld [vmem:[%s17 + $0x68] sm:$0xff]
  %v817 = vld [vmem:[%s17 + $0x70] sm:$0xff]
  %v818 = vld [vmem:[%s17 + $0x78] sm:$0xff]
  %v819 = vld [vmem:[%s17 + $0x80] sm:$0xff]
  %v820 = vld [vmem:[%s17 + $0x88] sm:$0xff]
  %v821 = vld [vmem:[%s17 + $0x90] sm:$0xff]
  %v822 = vld [vmem:[%s17 + $0x98] sm:$0xff]
  %v823 = vld [vmem:[%s17 + $0xa0] sm:$0xff]
  %v824 = vld [vmem:[%s17 + $0xa8] sm:$0xff]
  %v825 = vld [vmem:[%s17 + $0xb0] sm:$0xff]
  %v826 = vld [vmem:[%s17 + $0xb8] sm:$0xff]
  %v827 = vld [vmem:[%s17 + $0xc0] sm:$0xff]
  %v828 = vld [vmem:[%s17 + $0xc8] sm:$0xff]
  %v829 = vld [vmem:[%s17 + $0xd0] sm:$0xff]
  %v830 = vld [vmem:[%s17 + $0xd8] sm:$0xff]
  %v831 = vld [vmem:[%s17 + $0xe0] sm:$0xff]
  %v832 = vld [vmem:[%s17 + $0xe8] sm:$0xff]
  %v833 = vld [vmem:[%s17 + $0xf0] sm:$0xff]
  %v834 = vld [vmem:[%s17 + $0xf8] sm:$0xff]
  %v835 = vld [vmem:[%s17 + $0x100] sm:$0xff]
  %v836 = vld [vmem:[%s17 + $0x108] sm:$0xff]
  %v837 = vld [vmem:[%s17 + $0x110] sm:$0xff]
  %v838 = vld [vmem:[%s17 + $0x118] sm:$0xff]
  %v839 = vld [vmem:[%s18] sm:$0x7]
  %v841 = vlaneseq
  %v842 = vshrl.u32 %v841, 7
  %v843 = vsub.s32 0, %v842
  %v844 = vrot.slane %v839, %v843
  %v845 = vlaneseq
  %v846 = vshrl.u32 %v845, 7
  %v847 = vsub.s32 1, %v846
  %v848 = vrot.slane %v839, %v847
  %v849 = vlaneseq
  %v850 = vshrl.u32 %v849, 7
  %v851 = vsub.s32 2, %v850
  %v852 = vrot.slane %v839, %v851
  %856 = vmatprep.subr.mxu0 %v804
  %857 = vmatpush1.msra.mxu0 %v803
  %858 = vmatprep.subr.mxu0 %v807
  %859 = vmatpush1.msra.mxu0 %v806
  %860 = vmatprep.subr.mxu0 %v810
  %861 = vmatpush1.msra.mxu0 %v809
  %862 = vmatprep.subr.mxu0 %v813
  %863 = vmatpush1.msra.mxu0 %v812
  %864 = vmatprep.subr.mxu0 %v816
  %865 = vmatpush1.msra.mxu0 %v815
  %866 = vmatprep.subr.mxu0 %v819
  %867 = vmatpush1.msra.mxu0 %v818
  %868 = vmatprep.subr.mxu0 %v822
  %869 = vmatpush1.msra.mxu0 %v821
  %870 = vmatprep.subr.mxu0 %v825
  %871 = vmatpush1.msra.mxu0 %v824
  %872 = vmatprep.subr.mxu0 %v828
  %873 = vmatpush1.msra.mxu0 %v827
  %874 = vmatprep.subr.mxu0 %v831
  %875 = vmatpush1.msra.mxu0 %v830
  %876 = vmatprep.subr.mxu0 %v834
  %877 = vmatpush1.msra.mxu0 %v833
  %878 = vmatprep.subr.mxu0 %v837
  %879 = vmatpush1.msra.mxu0 %v836
  %880 = vmatprep.subr.mxu0 0.0
  %881 = vmatpush1.msra.mxu0 0.0
  %882 = vmatprep.subr.mxu0 0.0
  %883 = vmatpush1.msra.mxu0 0.0
  %884 = vmatprep.subr.mxu0 0.0
  %885 = vmatpush1.msra.mxu0 0.0
  %886 = vmatprep.subr.mxu0 0.0
  %887 = vmatpush1.msra.mxu0 0.0
  %888 = vmatprep.subr.mxu0 0.0
  %889 = vmatpush1.msra.mxu0 0.0
  %890 = vmatprep.subr.mxu0 0.0
  %891 = vmatpush1.msra.mxu0 0.0
  %892 = vmatprep.subr.mxu0 0.0
  %893 = vmatpush1.msra.mxu0 0.0
  %894 = vmatprep.subr.mxu0 0.0
  %895 = vmatpush1.msra.mxu0 0.0
  %896 = vmatprep.subr.mxu0 0.0
  %897 = vmatpush1.msra.mxu0 0.0
  %898 = vmatprep.subr.mxu0 0.0
  %899 = vmatpush1.msra.mxu0 0.0
  %900 = vmatprep.subr.mxu0 0.0
  %901 = vmatpush1.msra.mxu0 0.0
  %902 = vmatprep.subr.mxu0 0.0
  %903 = vmatpush1.msra.mxu0 0.0
  %904 = vmatprep.subr.mxu0 0.0
  %905 = vmatpush1.msra.mxu0 0.0
  %906 = vmatprep.subr.mxu0 0.0
  %907 = vmatpush1.msra.mxu0 0.0
  %908 = vmatprep.subr.mxu0 0.0
  %909 = vmatpush1.msra.mxu0 0.0
  %910 = vmatprep.subr.mxu0 0.0
  %911 = vmatpush1.msra.mxu0 0.0
  %912 = vmatprep.subr.mxu0 0.0
  %913 = vmatpush1.msra.mxu0 0.0
  %914 = vmatprep.subr.mxu0 0.0
  %915 = vmatpush1.msra.mxu0 0.0
  %916 = vmatprep.subr.mxu0 0.0
  %917 = vmatpush1.msra.mxu0 0.0
  %918 = vmatprep.subr.mxu0 0.0
  %919 = vmatpush1.msra.mxu0 0.0
  %920 = vmatprep.mubr.f32.mxu0 0.0
  %921 = vmatmul.mubr.f32.gmra.mrb[0].mxu0 %v532
  %v922 = vpop.f32.mrb[0].mxu0
  %v923 = vadd.f32 %v844, %v922
  %v924 = vpop.f32.mrb[0].mxu0
  %v925 = vadd.f32 %v848, %v924
  %926 = vdwg.mxu0
  %927 = vmatprep.subr.mxu0 0.0
  %928 = vmatpush1.msra.mxu0 %v805
  %929 = vmatprep.subr.mxu0 0.0
  %930 = vmatpush1.msra.mxu0 %v808
  %931 = vmatprep.subr.mxu0 0.0
  %932 = vmatpush1.msra.mxu0 %v811
  %933 = vmatprep.subr.mxu0 0.0
  %934 = vmatpush1.msra.mxu0 %v814
  %935 = vmatprep.subr.mxu0 0.0
  %936 = vmatpush1.msra.mxu0 %v817
  %937 = vmatprep.subr.mxu0 0.0
  %938 = vmatpush1.msra.mxu0 %v820
  %939 = vmatprep.subr.mxu0 0.0
  %940 = vmatpush1.msra.mxu0 %v823
  %941 = vmatprep.subr.mxu0 0.0
  %942 = vmatpush1.msra.mxu0 %v826
  %943 = vmatprep.subr.mxu0 0.0
  %944 = vmatpush1.msra.mxu0 %v829
  %945 = vmatprep.subr.mxu0 0.0
  %946 = vmatpush1.msra.mxu0 %v832
  %947 = vmatprep.subr.mxu0 0.0
  %948 = vmatpush1.msra.mxu0 %v835
  %949 = vmatprep.subr.mxu0 0.0
  %950 = vmatpush1.msra.mxu0 %v838
  %951 = vmatprep.subr.mxu0 0.0
  %952 = vmatpush1.msra.mxu0 0.0
  %953 = vmatprep.subr.mxu0 0.0
  %954 = vmatpush1.msra.mxu0 0.0
  %955 = vmatprep.subr.mxu0 0.0
  %956 = vmatpush1.msra.mxu0 0.0
  %957 = vmatprep.subr.mxu0 0.0
  %958 = vmatpush1.msra.mxu0 0.0
  %959 = vmatprep.subr.mxu0 0.0
  %960 = vmatpush1.msra.mxu0 0.0
  %961 = vmatprep.subr.mxu0 0.0
  %962 = vmatpush1.msra.mxu0 0.0
  %963 = vmatprep.subr.mxu0 0.0
  %964 = vmatpush1.msra.mxu0 0.0
  %965 = vmatprep.subr.mxu0 0.0
  %966 = vmatpush1.msra.mxu0 0.0
  %967 = vmatprep.subr.mxu0 0.0
  %968 = vmatpush1.msra.mxu0 0.0
  %969 = vmatprep.subr.mxu0 0.0
  %970 = vmatpush1.msra.mxu0 0.0
  %971 = vmatprep.subr.mxu0 0.0
  %972 = vmatpush1.msra.mxu0 0.0
  %973 = vmatprep.subr.mxu0 0.0
  %974 = vmatpush1.msra.mxu0 0.0
  %975 = vmatprep.subr.mxu0 0.0
  %976 = vmatpush1.msra.mxu0 0.0
  %977 = vmatprep.subr.mxu0 0.0
  %978 = vmatpush1.msra.mxu0 0.0
  %979 = vmatprep.subr.mxu0 0.0
  %980 = vmatpush1.msra.mxu0 0.0
  %981 = vmatprep.subr.mxu0 0.0
  %982 = vmatpush1.msra.mxu0 0.0
  %983 = vmatprep.subr.mxu0 0.0
  %984 = vmatpush1.msra.mxu0 0.0
  %985 = vmatprep.subr.mxu0 0.0
  %986 = vmatpush1.msra.mxu0 0.0
  %987 = vmatprep.subr.mxu0 0.0
  %988 = vmatpush1.msra.mxu0 0.0
  %989 = vmatprep.subr.mxu0 0.0
  %990 = vmatpush1.msra.mxu0 0.0
  %991 = vmatprep.mubr.f32.mxu0 0.0
  %992 = vmatmul.mubr.f32.gmra.mrb[0].mxu0 %v532
  %v993 = vpop.f32.mrb[0].mxu0
  %v994 = vadd.f32 %v852, %v993
  %v995 = vpop.f32.mrb[0].mxu0
  %996 = vdwg.mxu0
  %v997 = vld [vmem:[%s19] sm:$0xff]
  %v998 = vld [vmem:[%s19 + $0x8] sm:$0xff]
  %v999 = vld [vmem:[%s19 + $0x10] sm:$0xff]
  %v1000 = vld [vmem:[%s19 + $0x18] sm:$0xff]
  %v1001 = vld [vmem:[%s19 + $0x20] sm:$0xff]
  %v1002 = vld [vmem:[%s19 + $0x28] sm:$0xff]
  %v1003 = vld [vmem:[%s19 + $0x30] sm:$0xff]
  %v1004 = vld [vmem:[%s19 + $0x38] sm:$0xff]
  %v1005 = vld [vmem:[%s19 + $0x40] sm:$0xff]
  %v1006 = vld [vmem:[%s19 + $0x48] sm:$0xff]
  %v1007 = vld [vmem:[%s19 + $0x50] sm:$0xff]
  %v1008 = vld [vmem:[%s19 + $0x58] sm:$0xff]
  %v1009 = vld [vmem:[%s19 + $0x60] sm:$0xff]
  %v1010 = vld [vmem:[%s19 + $0x68] sm:$0xff]
  %v1011 = vld [vmem:[%s19 + $0x70] sm:$0xff]
  %v1012 = vld [vmem:[%s19 + $0x78] sm:$0xff]
  %v1013 = vld [vmem:[%s19 + $0x80] sm:$0xff]
  %v1014 = vld [vmem:[%s19 + $0x88] sm:$0xff]
  %v1015 = vld [vmem:[%s19 + $0x90] sm:$0xff]
  %v1016 = vld [vmem:[%s19 + $0x98] sm:$0xff]
  %v1017 = vld [vmem:[%s19 + $0xa0] sm:$0xff]
  %v1018 = vld [vmem:[%s19 + $0xa8] sm:$0xff]
  %v1019 = vld [vmem:[%s19 + $0xb0] sm:$0xff]
  %v1020 = vld [vmem:[%s19 + $0xb8] sm:$0xff]
  %v1021 = vld [vmem:[%s19 + $0xc0] sm:$0xff]
  %v1022 = vld [vmem:[%s19 + $0xc8] sm:$0xff]
  %v1023 = vld [vmem:[%s19 + $0xd0] sm:$0xff]
  %v1024 = vld [vmem:[%s19 + $0xd8] sm:$0xff]
  %v1025 = vld [vmem:[%s19 + $0xe0] sm:$0xff]
  %v1026 = vld [vmem:[%s19 + $0xe8] sm:$0xff]
  %v1027 = vld [vmem:[%s19 + $0xf0] sm:$0xff]
  %v1028 = vld [vmem:[%s19 + $0xf8] sm:$0xff]
  %v1029 = vld [vmem:[%s19 + $0x100] sm:$0xff]
  %v1030 = vld [vmem:[%s19 + $0x108] sm:$0xff]
  %v1031 = vld [vmem:[%s19 + $0x110] sm:$0xff]
  %v1032 = vld [vmem:[%s19 + $0x118] sm:$0xff]
  %v1033 = vld [vmem:[%s19 + $0x120] sm:$0xff]
  %v1034 = vld [vmem:[%s19 + $0x128] sm:$0xff]
  %v1035 = vld [vmem:[%s19 + $0x130] sm:$0xff]
  %v1036 = vld [vmem:[%s19 + $0x138] sm:$0xff]
  %v1037 = vld [vmem:[%s19 + $0x140] sm:$0xff]
  %v1038 = vld [vmem:[%s19 + $0x148] sm:$0xff]
  %v1039 = vld [vmem:[%s19 + $0x150] sm:$0xff]
  %v1040 = vld [vmem:[%s19 + $0x158] sm:$0xff]
  %v1041 = vld [vmem:[%s19 + $0x160] sm:$0xff]
  %v1042 = vld [vmem:[%s19 + $0x168] sm:$0xff]
  %v1043 = vld [vmem:[%s19 + $0x170] sm:$0xff]
  %v1044 = vld [vmem:[%s19 + $0x178] sm:$0xff]
  %v1045 = vld [vmem:[%s19 + $0x180] sm:$0xff]
  %v1046 = vld [vmem:[%s19 + $0x188] sm:$0xff]
  %v1047 = vld [vmem:[%s19 + $0x190] sm:$0xff]
  %v1048 = vld [vmem:[%s19 + $0x198] sm:$0xff]
  %v1049 = vld [vmem:[%s19 + $0x1a0] sm:$0xff]
  %v1050 = vld [vmem:[%s19 + $0x1a8] sm:$0xff]
  %v1051 = vld [vmem:[%s19 + $0x1b0] sm:$0xff]
  %v1052 = vld [vmem:[%s19 + $0x1b8] sm:$0xff]
  %v1053 = vld [vmem:[%s19 + $0x1c0] sm:$0xff]
  %v1054 = vld [vmem:[%s19 + $0x1c8] sm:$0xff]
  %v1055 = vld [vmem:[%s19 + $0x1d0] sm:$0xff]
  %v1056 = vld [vmem:[%s19 + $0x1d8] sm:$0xff]
  %v1057 = vld [vmem:[%s19 + $0x1e0] sm:$0xff]
  %v1058 = vld [vmem:[%s19 + $0x1e8] sm:$0xff]
  %v1059 = vld [vmem:[%s19 + $0x1f0] sm:$0xff]
  %v1060 = vld [vmem:[%s19 + $0x1f8] sm:$0xff]
  %v1061 = vld [vmem:[%s19 + $0x200] sm:$0xff]
  %v1062 = vld [vmem:[%s19 + $0x208] sm:$0xff]
  %v1063 = vld [vmem:[%s19 + $0x210] sm:$0xff]
  %v1064 = vld [vmem:[%s19 + $0x218] sm:$0xff]
  %v1065 = vld [vmem:[%s19 + $0x220] sm:$0xff]
  %v1066 = vld [vmem:[%s19 + $0x228] sm:$0xff]
  %v1067 = vld [vmem:[%s19 + $0x230] sm:$0xff]
  %v1068 = vld [vmem:[%s19 + $0x238] sm:$0xff]
  %v1069 = vld [vmem:[%s19 + $0x240] sm:$0xff]
  %v1070 = vld [vmem:[%s19 + $0x248] sm:$0xff]
  %v1071 = vld [vmem:[%s19 + $0x250] sm:$0xff]
  %v1072 = vld [vmem:[%s19 + $0x258] sm:$0xff]
  %v1073 = vld [vmem:[%s19 + $0x260] sm:$0xff]
  %v1074 = vld [vmem:[%s19 + $0x268] sm:$0xff]
  %v1075 = vld [vmem:[%s19 + $0x270] sm:$0xff]
  %v1076 = vld [vmem:[%s19 + $0x278] sm:$0xff]
  %v1077 = vld [vmem:[%s19 + $0x280] sm:$0xff]
  %v1078 = vld [vmem:[%s19 + $0x288] sm:$0xff]
  %v1079 = vld [vmem:[%s19 + $0x290] sm:$0xff]
  %v1080 = vld [vmem:[%s19 + $0x298] sm:$0xff]
  %v1081 = vld [vmem:[%s19 + $0x2a0] sm:$0xff]
  %v1082 = vld [vmem:[%s19 + $0x2a8] sm:$0xff]
  %v1083 = vld [vmem:[%s19 + $0x2b0] sm:$0xff]
  %v1084 = vld [vmem:[%s19 + $0x2b8] sm:$0xff]
  %v1085 = vld [vmem:[%s19 + $0x2c0] sm:$0xff]
  %v1086 = vld [vmem:[%s19 + $0x2c8] sm:$0xff]
  %v1087 = vld [vmem:[%s19 + $0x2d0] sm:$0xff]
  %v1088 = vld [vmem:[%s19 + $0x2d8] sm:$0xff]
  %v1089 = vld [vmem:[%s19 + $0x2e0] sm:$0xff]
  %v1090 = vld [vmem:[%s19 + $0x2e8] sm:$0xff]
  %v1091 = vld [vmem:[%s19 + $0x2f0] sm:$0xff]
  %v1092 = vld [vmem:[%s19 + $0x2f8] sm:$0xff]
  %v1093 = vld [vmem:[%s20] sm:$0x3]
  %v1095 = vlaneseq
  %v1096 = vshrl.u32 %v1095, 7
  %v1097 = vsub.s32 0, %v1096
  %v1098 = vrot.slane %v1093, %v1097
  %v1099 = vlaneseq
  %v1100 = vshrl.u32 %v1099, 7
  %v1101 = vsub.s32 1, %v1100
  %v1102 = vrot.slane %v1093, %v1101
  %1105 = vmatprep.subr.mxu0 %v998
  %1106 = vmatpush1.msra.mxu0 %v997
  %1107 = vmatprep.subr.mxu0 %v1000
  %1108 = vmatpush1.msra.mxu0 %v999
  %1109 = vmatprep.subr.mxu0 %v1002
  %1110 = vmatpush1.msra.mxu0 %v1001
  %1111 = vmatprep.subr.mxu0 %v1004
  %1112 = vmatpush1.msra.mxu0 %v1003
  %1113 = vmatprep.subr.mxu0 %v1006
  %1114 = vmatpush1.msra.mxu0 %v1005
  %1115 = vmatprep.subr.mxu0 %v1008
  %1116 = vmatpush1.msra.mxu0 %v1007
  %1117 = vmatprep.subr.mxu0 %v1010
  %1118 = vmatpush1.msra.mxu0 %v1009
  %1119 = vmatprep.subr.mxu0 %v1012
  %1120 = vmatpush1.msra.mxu0 %v1011
  %1121 = vmatprep.subr.mxu0 %v1014
  %1122 = vmatpush1.msra.mxu0 %v1013
  %1123 = vmatprep.subr.mxu0 %v1016
  %1124 = vmatpush1.msra.mxu0 %v1015
  %1125 = vmatprep.subr.mxu0 %v1018
  %1126 = vmatpush1.msra.mxu0 %v1017
  %1127 = vmatprep.subr.mxu0 %v1020
  %1128 = vmatpush1.msra.mxu0 %v1019
  %1129 = vmatprep.subr.mxu0 %v1022
  %1130 = vmatpush1.msra.mxu0 %v1021
  %1131 = vmatprep.subr.mxu0 %v1024
  %1132 = vmatpush1.msra.mxu0 %v1023
  %1133 = vmatprep.subr.mxu0 %v1026
  %1134 = vmatpush1.msra.mxu0 %v1025
  %1135 = vmatprep.subr.mxu0 %v1028
  %1136 = vmatpush1.msra.mxu0 %v1027
  %1137 = vmatprep.subr.mxu0 %v1030
  %1138 = vmatpush1.msra.mxu0 %v1029
  %1139 = vmatprep.subr.mxu0 %v1032
  %1140 = vmatpush1.msra.mxu0 %v1031
  %1141 = vmatprep.subr.mxu0 %v1034
  %1142 = vmatpush1.msra.mxu0 %v1033
  %1143 = vmatprep.subr.mxu0 %v1036
  %1144 = vmatpush1.msra.mxu0 %v1035
  %1145 = vmatprep.subr.mxu0 %v1038
  %1146 = vmatpush1.msra.mxu0 %v1037
  %1147 = vmatprep.subr.mxu0 %v1040
  %1148 = vmatpush1.msra.mxu0 %v1039
  %1149 = vmatprep.subr.mxu0 %v1042
  %1150 = vmatpush1.msra.mxu0 %v1041
  %1151 = vmatprep.subr.mxu0 %v1044
  %1152 = vmatpush1.msra.mxu0 %v1043
  %1153 = vmatprep.subr.mxu0 %v1046
  %1154 = vmatpush1.msra.mxu0 %v1045
  %1155 = vmatprep.subr.mxu0 %v1048
  %1156 = vmatpush1.msra.mxu0 %v1047
  %1157 = vmatprep.subr.mxu0 %v1050
  %1158 = vmatpush1.msra.mxu0 %v1049
  %1159 = vmatprep.subr.mxu0 %v1052
  %1160 = vmatpush1.msra.mxu0 %v1051
  %1161 = vmatprep.subr.mxu0 %v1054
  %1162 = vmatpush1.msra.mxu0 %v1053
  %1163 = vmatprep.subr.mxu0 %v1056
  %1164 = vmatpush1.msra.mxu0 %v1055
  %1165 = vmatprep.subr.mxu0 %v1058
  %1166 = vmatpush1.msra.mxu0 %v1057
  %1167 = vmatprep.subr.mxu0 %v1060
  %1168 = vmatpush1.msra.mxu0 %v1059
  %1169 = vmatprep.mubr.f32.mxu0 %v925
  %1170 = vmatmul.mubr.f32.gmra.mrb[0].mxu0 %v923
  %v1171 = vpop.f32.mrb[0].mxu0
  %v1172 = vadd.f32 %v1098, %v1171
  %v1173 = vpop.f32.mrb[0].mxu0
  %v1174 = vadd.f32 %v1102, %v1173
  %1175 = vdwg.mxu0
  %1176 = vmatprep.subr.mxu0 %v1062
  %1177 = vmatpush1.msra.mxu0 %v1061
  %1178 = vmatprep.subr.mxu0 %v1064
  %1179 = vmatpush1.msra.mxu0 %v1063
  %1180 = vmatprep.subr.mxu0 %v1066
  %1181 = vmatpush1.msra.mxu0 %v1065
  %1182 = vmatprep.subr.mxu0 %v1068
  %1183 = vmatpush1.msra.mxu0 %v1067
  %1184 = vmatprep.subr.mxu0 %v1070
  %1185 = vmatpush1.msra.mxu0 %v1069
  %1186 = vmatprep.subr.mxu0 %v1072
  %1187 = vmatpush1.msra.mxu0 %v1071
  %1188 = vmatprep.subr.mxu0 %v1074
  %1189 = vmatpush1.msra.mxu0 %v1073
  %1190 = vmatprep.subr.mxu0 %v1076
  %1191 = vmatpush1.msra.mxu0 %v1075
  %1192 = vmatprep.subr.mxu0 %v1078
  %1193 = vmatpush1.msra.mxu0 %v1077
  %1194 = vmatprep.subr.mxu0 %v1080
  %1195 = vmatpush1.msra.mxu0 %v1079
  %1196 = vmatprep.subr.mxu0 %v1082
  %1197 = vmatpush1.msra.mxu0 %v1081
  %1198 = vmatprep.subr.mxu0 %v1084
  %1199 = vmatpush1.msra.mxu0 %v1083
  %1200 = vmatprep.subr.mxu0 %v1086
  %1201 = vmatpush1.msra.mxu0 %v1085
  %1202 = vmatprep.subr.mxu0 %v1088
  %1203 = vmatpush1.msra.mxu0 %v1087
  %1204 = vmatprep.subr.mxu0 %v1090
  %1205 = vmatpush1.msra.mxu0 %v1089
  %1206 = vmatprep.subr.mxu0 %v1092
  %1207 = vmatpush1.msra.mxu0 %v1091
  %1208 = vmatprep.subr.mxu0 0.0
  %1209 = vmatpush1.msra.mxu0 0.0
  %1210 = vmatprep.subr.mxu0 0.0
  %1211 = vmatpush1.msra.mxu0 0.0
  %1212 = vmatprep.subr.mxu0 0.0
  %1213 = vmatpush1.msra.mxu0 0.0
  %1214 = vmatprep.subr.mxu0 0.0
  %1215 = vmatpush1.msra.mxu0 0.0
  %1216 = vmatprep.subr.mxu0 0.0
  %1217 = vmatpush1.msra.mxu0 0.0
  %1218 = vmatprep.subr.mxu0 0.0
  %1219 = vmatpush1.msra.mxu0 0.0
  %1220 = vmatprep.subr.mxu0 0.0
  %1221 = vmatpush1.msra.mxu0 0.0
  %1222 = vmatprep.subr.mxu0 0.0
  %1223 = vmatpush1.msra.mxu0 0.0
  %1224 = vmatprep.subr.mxu0 0.0
  %1225 = vmatpush1.msra.mxu0 0.0
  %1226 = vmatprep.subr.mxu0 0.0
  %1227 = vmatpush1.msra.mxu0 0.0
  %1228 = vmatprep.subr.mxu0 0.0
  %1229 = vmatpush1.msra.mxu0 0.0
  %1230 = vmatprep.subr.mxu0 0.0
  %1231 = vmatpush1.msra.mxu0 0.0
  %1232 = vmatprep.subr.mxu0 0.0
  %1233 = vmatpush1.msra.mxu0 0.0
  %1234 = vmatprep.subr.mxu0 0.0
  %1235 = vmatpush1.msra.mxu0 0.0
  %1236 = vmatprep.subr.mxu0 0.0
  %1237 = vmatpush1.msra.mxu0 0.0
  %1238 = vmatprep.subr.mxu0 0.0
  %1239 = vmatpush1.msra.mxu0 0.0
  %1240 = vmatprep.mubr.f32.mxu0 0.0
  %1241 = vmatmul.mubr.f32.gmra.mrb[0].mxu0 %v994
  %v1242 = vpop.f32.mrb[0].mxu0
  %v1243 = vadd.f32 %v1172, %v1242
  %v1244 = vpop.f32.mrb[0].mxu0
  %v1245 = vadd.f32 %v1174, %v1244
  %1246 = vdwg.mxu0
  %v1247 = vld [vmem:[%s21] sm:$0xff]
  %v1248 = vld [vmem:[%s21 + $0x8] sm:$0xff]
  %v1249 = vld [vmem:[%s21 + $0x10] sm:$0xff]
  %v1250 = vld [vmem:[%s21 + $0x18] sm:$0xff]
  %v1251 = vld [vmem:[%s21 + $0x20] sm:$0xff]
  %v1252 = vld [vmem:[%s21 + $0x28] sm:$0xff]
  %v1253 = vld [vmem:[%s21 + $0x30] sm:$0xff]
  %v1254 = vld [vmem:[%s21 + $0x38] sm:$0xff]
  %v1255 = vld [vmem:[%s21 + $0x40] sm:$0xff]
  %v1256 = vld [vmem:[%s21 + $0x48] sm:$0xff]
  %v1257 = vld [vmem:[%s21 + $0x50] sm:$0xff]
  %v1258 = vld [vmem:[%s21 + $0x58] sm:$0xff]
  %v1259 = vld [vmem:[%s22] sm:$0x1]
  %v1261 = vlaneseq
  %v1262 = vshrl.u32 %v1261, 7
  %v1263 = vsub.s32 0, %v1262
  %v1264 = vrot.slane %v1259, %v1263
  %1266 = vmatprep.subr.mxu0 0.0
  %1267 = vmatpush1.msra.mxu0 %v1247
  %1268 = vmatprep.subr.mxu0 0.0
  %1269 = vmatpush1.msra.mxu0 %v1248
  %1270 = vmatprep.subr.mxu0 0.0
  %1271 = vmatpush1.msra.mxu0 %v1249
  %1272 = vmatprep.subr.mxu0 0.0
  %1273 = vmatpush1.msra.mxu0 %v1250
  %1274 = vmatprep.subr.mxu0 0.0
  %1275 = vmatpush1.msra.mxu0 %v1251
  %1276 = vmatprep.subr.mxu0 0.0
  %1277 = vmatpush1.msra.mxu0 %v1252
  %1278 = vmatprep.subr.mxu0 0.0
  %1279 = vmatpush1.msra.mxu0 %v1253
  %1280 = vmatprep.subr.mxu0 0.0
  %1281 = vmatpush1.msra.mxu0 %v1254
  %1282 = vmatprep.subr.mxu0 0.0
  %1283 = vmatpush1.msra.mxu0 %v1255
  %1284 = vmatprep.subr.mxu0 0.0
  %1285 = vmatpush1.msra.mxu0 %v1256
  %1286 = vmatprep.subr.mxu0 0.0
  %1287 = vmatpush1.msra.mxu0 %v1257
  %1288 = vmatprep.subr.mxu0 0.0
  %1289 = vmatpush1.msra.mxu0 %v1258
  %1290 = vmatprep.subr.mxu0 0.0
  %1291 = vmatpush1.msra.mxu0 0.0
  %1292 = vmatprep.subr.mxu0 0.0
  %1293 = vmatpush1.msra.mxu0 0.0
  %1294 = vmatprep.subr.mxu0 0.0
  %1295 = vmatpush1.msra.mxu0 0.0
  %1296 = vmatprep.subr.mxu0 0.0
  %1297 = vmatpush1.msra.mxu0 0.0
  %1298 = vmatprep.subr.mxu0 0.0
  %1299 = vmatpush1.msra.mxu0 0.0
  %1300 = vmatprep.subr.mxu0 0.0
  %1301 = vmatpush1.msra.mxu0 0.0
  %1302 = vmatprep.subr.mxu0 0.0
  %1303 = vmatpush1.msra.mxu0 0.0
  %1304 = vmatprep.subr.mxu0 0.0
  %1305 = vmatpush1.msra.mxu0 0.0
  %1306 = vmatprep.subr.mxu0 0.0
  %1307 = vmatpush1.msra.mxu0 0.0
  %1308 = vmatprep.subr.mxu0 0.0
  %1309 = vmatpush1.msra.mxu0 0.0
  %1310 = vmatprep.subr.mxu0 0.0
  %1311 = vmatpush1.msra.mxu0 0.0
  %1312 = vmatprep.subr.mxu0 0.0
  %1313 = vmatpush1.msra.mxu0 0.0
  %1314 = vmatprep.subr.mxu0 0.0
  %1315 = vmatpush1.msra.mxu0 0.0
  %1316 = vmatprep.subr.mxu0 0.0
  %1317 = vmatpush1.msra.mxu0 0.0
  %1318 = vmatprep.subr.mxu0 0.0
  %1319 = vmatpush1.msra.mxu0 0.0
  %1320 = vmatprep.subr.mxu0 0.0
  %1321 = vmatpush1.msra.mxu0 0.0
  %1322 = vmatprep.subr.mxu0 0.0
  %1323 = vmatpush1.msra.mxu0 0.0
  %1324 = vmatprep.subr.mxu0 0.0
  %1325 = vmatpush1.msra.mxu0 0.0
  %1326 = vmatprep.subr.mxu0 0.0
  %1327 = vmatpush1.msra.mxu0 0.0
  %1328 = vmatprep.subr.mxu0 0.0
  %1329 = vmatpush1.msra.mxu0 0.0
  %1330 = vmatprep.mubr.f32.mxu0 0.0
  %1331 = vmatmul.mubr.f32.gmra.mrb[0].mxu0 %v532
  %v1332 = vpop.f32.mrb[0].mxu0
  %v1333 = vadd.f32 %v1264, %v1332
  %v1334 = vpop.f32.mrb[0].mxu0
  %1335 = vdwg.mxu0
  %vm1336 = vcmask 11264
  %v1337 = vsel %vm1336, %v1333, -inf
  %1338 = vmax.xlane.f32.xlu0 %v1337
  %v1339 = vpop.xlane.xlu0 %1338
  %v1340 = vsub.f32 %v1333, %v1339
  %v1341 = vmul.f32 %v1340, 1.442695
  %v1342 = vpow.pop %v1341
  %v1343 = vsel %vm1336, %v1342, 0.0
  %1344 = vadd.xlane.f32.xlu0 %v1343
  %v1345 = vpop.xlane.xlu0 %1344
  %v1346 = vrcp.pop %v1345
  %v1347 = vmul.f32 %v1342, %v1346
  %1349 = vset.pattern.permute.xlu0 0
  %1350 = vperm.xlu0 %1349, %v1347
  %v1351 = vpop.permute.xlu0 %1350
  %v1353 = vmul.f32 %v1351, %v802
  %1354 = vset.pattern.permute.xlu0 1
  %1355 = vperm.xlu0 %1354, %v1347
  %v1356 = vpop.permute.xlu0 %1355
  %v1358 = vmul.f32 %v1356, %v1243
  %v1359 = vmul.f32 %v1356, %v1245
  %v1360 = vld [vmem:[%s23] sm:$0xff]
  %v1361 = vld [vmem:[%s23 + $0x8] sm:$0xff]
  %v1362 = vld [vmem:[%s23 + $0x10] sm:$0xff]
  %v1363 = vld [vmem:[%s23 + $0x18] sm:$0xff]
  %v1364 = vld [vmem:[%s24] sm:$0xff]
  %v1365 = vld [vmem:[%s24 + $0x8] sm:$0xff]
  %v1366 = vld [vmem:[%s24 + $0x10] sm:$0xff]
  %v1367 = vld [vmem:[%s24 + $0x18] sm:$0xff]
  %v1368 = vld [vmem:[%s24 + $0x20] sm:$0xff]
  %v1369 = vld [vmem:[%s24 + $0x28] sm:$0xff]
  %v1370 = vld [vmem:[%s24 + $0x30] sm:$0xff]
  %v1371 = vld [vmem:[%s24 + $0x38] sm:$0xff]
  %v1372 = vld [vmem:[%s24 + $0x40] sm:$0xff]
  %v1373 = vld [vmem:[%s24 + $0x48] sm:$0xff]
  %v1374 = vld [vmem:[%s24 + $0x50] sm:$0xff]
  %v1375 = vld [vmem:[%s24 + $0x58] sm:$0xff]
  %v1376 = vld [vmem:[%s24 + $0x60] sm:$0xff]
  %v1377 = vld [vmem:[%s24 + $0x68] sm:$0xff]
  %v1378 = vld [vmem:[%s24 + $0x70] sm:$0xff]
  %v1379 = vld [vmem:[%s24 + $0x78] sm:$0xff]
  %v1380 = vld [vmem:[%s24 + $0x80] sm:$0xff]
  %v1381 = vld [vmem:[%s24 + $0x88] sm:$0xff]
  %v1382 = vld [vmem:[%s24 + $0x90] sm:$0xff]
  %v1383 = vld [vmem:[%s24 + $0x98] sm:$0xff]
  %v1384 = vld [vmem:[%s24 + $0xa0] sm:$0xff]
  %v1385 = vld [vmem:[%s24 + $0xa8] sm:$0xff]
  %v1386 = vld [vmem:[%s24 + $0xb0] sm:$0xff]
  %v1387 = vld [vmem:[%s24 + $0xb8] sm:$0xff]
  %v1389 = vsel %vm190, %v1359, 0
  %1391 = vmatprep.subr.mxu0 0.0
  %1392 = vmatpush1.msra.mxu0 %v1364
  %1393 = vmatprep.subr.mxu0 0.0
  %1394 = vmatpush1.msra.mxu0 %v1365
  %1395 = vmatprep.subr.mxu0 0.0
  %1396 = vmatpush1.msra.mxu0 %v1366
  %1397 = vmatprep.subr.mxu0 0.0
  %1398 = vmatpush1.msra.mxu0 %v1367
  %1399 = vmatprep.subr.mxu0 0.0
  %1400 = vmatpush1.msra.mxu0 %v1368
  %1401 = vmatprep.subr.mxu0 0.0
  %1402 = vmatpush1.msra.mxu0 %v1369
  %1403 = vmatprep.subr.mxu0 0.0
  %1404 = vmatpush1.msra.mxu0 %v1370
  %1405 = vmatprep.subr.mxu0 0.0
  %1406 = vmatpush1.msra.mxu0 %v1371
  %1407 = vmatprep.subr.mxu0 0.0
  %1408 = vmatpush1.msra.mxu0 %v1372
  %1409 = vmatprep.subr.mxu0 0.0
  %1410 = vmatpush1.msra.mxu0 %v1373
  %1411 = vmatprep.subr.mxu0 0.0
  %1412 = vmatpush1.msra.mxu0 %v1374
  %1413 = vmatprep.subr.mxu0 0.0
  %1414 = vmatpush1.msra.mxu0 %v1375
  %1415 = vmatprep.subr.mxu0 0.0
  %1416 = vmatpush1.msra.mxu0 %v1376
  %1417 = vmatprep.subr.mxu0 0.0
  %1418 = vmatpush1.msra.mxu0 %v1377
  %1419 = vmatprep.subr.mxu0 0.0
  %1420 = vmatpush1.msra.mxu0 %v1378
  %1421 = vmatprep.subr.mxu0 0.0
  %1422 = vmatpush1.msra.mxu0 %v1379
  %1423 = vmatprep.subr.mxu0 0.0
  %1424 = vmatpush1.msra.mxu0 %v1380
  %1425 = vmatprep.subr.mxu0 0.0
  %1426 = vmatpush1.msra.mxu0 %v1381
  %1427 = vmatprep.subr.mxu0 0.0
  %1428 = vmatpush1.msra.mxu0 %v1382
  %1429 = vmatprep.subr.mxu0 0.0
  %1430 = vmatpush1.msra.mxu0 %v1383
  %1431 = vmatprep.subr.mxu0 0.0
  %1432 = vmatpush1.msra.mxu0 %v1384
  %1433 = vmatprep.subr.mxu0 0.0
  %1434 = vmatpush1.msra.mxu0 %v1385
  %1435 = vmatprep.subr.mxu0 0.0
  %1436 = vmatpush1.msra.mxu0 %v1386
  %1437 = vmatprep.subr.mxu0 0.0
  %1438 = vmatpush1.msra.mxu0 %v1387
  %1439 = vmatprep.subr.mxu0 0.0
  %1440 = vmatpush1.msra.mxu0 0.0
  %1441 = vmatprep.subr.mxu0 0.0
  %1442 = vmatpush1.msra.mxu0 0.0
  %1443 = vmatprep.subr.mxu0 0.0
  %1444 = vmatpush1.msra.mxu0 0.0
  %1445 = vmatprep.subr.mxu0 0.0
  %1446 = vmatpush1.msra.mxu0 0.0
  %1447 = vmatprep.subr.mxu0 0.0
  %1448 = vmatpush1.msra.mxu0 0.0
  %1449 = vmatprep.subr.mxu0 0.0
  %1450 = vmatpush1.msra.mxu0 0.0
  %1451 = vmatprep.subr.mxu0 0.0
  %1452 = vmatpush1.msra.mxu0 0.0
  %1453 = vmatprep.subr.mxu0 0.0
  %1454 = vmatpush1.msra.mxu0 0.0
  %1455 = vmatprep.mubr.f32.mxu0 %v1389
  %1456 = vmatmul.mubr.f32.gmra.mrb[0].mxu0 %v1358
  %v1457 = vpop.f32.mrb[0].mxu0
  %v1458 = vadd.f32 0.0, %v1457
  %v1459 = vpop.f32.mrb[0].mxu0
  %1460 = vdwg.mxu0
  %v1462 = vsel %vm101, %v1353, 0
  %1464 = vmatprep.subr.mxu0 0.0
  %1465 = vmatpush1.msra.mxu0 %v1360
  %1466 = vmatprep.subr.mxu0 0.0
  %1467 = vmatpush1.msra.mxu0 %v1361
  %1468 = vmatprep.subr.mxu0 0.0
  %1469 = vmatpush1.msra.mxu0 %v1362
  %1470 = vmatprep.subr.mxu0 0.0
  %1471 = vmatpush1.msra.mxu0 %v1363
  %1472 = vmatprep.subr.mxu0 0.0
  %1473 = vmatpush1.msra.mxu0 0.0
  %1474 = vmatprep.subr.mxu0 0.0
  %1475 = vmatpush1.msra.mxu0 0.0
  %1476 = vmatprep.subr.mxu0 0.0
  %1477 = vmatpush1.msra.mxu0 0.0
  %1478 = vmatprep.subr.mxu0 0.0
  %1479 = vmatpush1.msra.mxu0 0.0
  %1480 = vmatprep.subr.mxu0 0.0
  %1481 = vmatpush1.msra.mxu0 0.0
  %1482 = vmatprep.subr.mxu0 0.0
  %1483 = vmatpush1.msra.mxu0 0.0
  %1484 = vmatprep.subr.mxu0 0.0
  %1485 = vmatpush1.msra.mxu0 0.0
  %1486 = vmatprep.subr.mxu0 0.0
  %1487 = vmatpush1.msra.mxu0 0.0
  %1488 = vmatprep.subr.mxu0 0.0
  %1489 = vmatpush1.msra.mxu0 0.0
  %1490 = vmatprep.subr.mxu0 0.0
  %1491 = vmatpush1.msra.mxu0 0.0
  %1492 = vmatprep.subr.mxu0 0.0
  %1493 = vmatpush1.msra.mxu0 0.0
  %1494 = vmatprep.subr.mxu0 0.0
  %1495 = vmatpush1.msra.mxu0 0.0
  %1496 = vmatprep.subr.mxu0 0.0
  %1497 = vmatpush1.msra.mxu0 0.0
  %1498 = vmatprep.subr.mxu0 0.0
  %1499 = vmatpush1.msra.mxu0 0.0
  %1500 = vmatprep.subr.mxu0 0.0
  %1501 = vmatpush1.msra.mxu0 0.0
  %1502 = vmatprep.subr.mxu0 0.0
  %1503 = vmatpush1.msra.mxu0 0.0
  %1504 = vmatprep.subr.mxu0 0.0
  %1505 = vmatpush1.msra.mxu0 0.0
  %1506 = vmatprep.subr.mxu0 0.0
  %1507 = vmatpush1.msra.mxu0 0.0
  %1508 = vmatprep.subr.mxu0 0.0
  %1509 = vmatpush1.msra.mxu0 0.0
  %1510 = vmatprep.subr.mxu0 0.0
  %1511 = vmatpush1.msra.mxu0 0.0
  %1512 = vmatprep.subr.mxu0 0.0
  %1513 = vmatpush1.msra.mxu0 0.0
  %1514 = vmatprep.subr.mxu0 0.0
  %1515 = vmatpush1.msra.mxu0 0.0
  %1516 = vmatprep.subr.mxu0 0.0
  %1517 = vmatpush1.msra.mxu0 0.0
  %1518 = vmatprep.subr.mxu0 0.0
  %1519 = vmatpush1.msra.mxu0 0.0
  %1520 = vmatprep.subr.mxu0 0.0
  %1521 = vmatpush1.msra.mxu0 0.0
  %1522 = vmatprep.subr.mxu0 0.0
  %1523 = vmatpush1.msra.mxu0 0.0
  %1524 = vmatprep.subr.mxu0 0.0
  %1525 = vmatpush1.msra.mxu0 0.0
  %1526 = vmatprep.subr.mxu0 0.0
  %1527 = vmatpush1.msra.mxu0 0.0
  %1528 = vmatprep.mubr.f32.mxu0 0.0
  %1529 = vmatmul.mubr.f32.gmra.mrb[0].mxu0 %v1462
  %v1530 = vpop.f32.mrb[0].mxu0
  %v1531 = vadd.f32 %v1458, %v1530
  %v1532 = vpop.f32.mrb[0].mxu0
  %1533 = vdwg.mxu0
  %v1534 = vld [vmem:[%s25] sm:$0x1]
  %v1536 = vlaneseq
  %v1537 = vshrl.u32 %v1536, 7
  %v1538 = vsub.s32 0, %v1537
  %v1539 = vrot.slane %v1534, %v1538
  %v1541 = vadd.f32 %v1531, %v1539
  %v1542 = vld [vmem:[%s26] sm:$0xff]
  %v1543 = vld [vmem:[%s26 + $0x8] sm:$0xff]
  %v1544 = vld [vmem:[%s26 + $0x10] sm:$0xff]
  %v1545 = vld [vmem:[%s26 + $0x18] sm:$0xff]
  %v1546 = vld [vmem:[%s26 + $0x20] sm:$0xff]
  %v1547 = vld [vmem:[%s26 + $0x28] sm:$0xff]
  %v1548 = vld [vmem:[%s26 + $0x30] sm:$0xff]
  %v1549 = vld [vmem:[%s26 + $0x38] sm:$0xff]
  %v1550 = vld [vmem:[%s26 + $0x40] sm:$0xff]
  %v1551 = vld [vmem:[%s26 + $0x48] sm:$0xff]
  %v1552 = vld [vmem:[%s26 + $0x50] sm:$0xff]
  %v1553 = vld [vmem:[%s26 + $0x58] sm:$0xff]
  %v1554 = vld [vmem:[%s27] sm:$0x1]
  %v1556 = vlaneseq
  %v1557 = vshrl.u32 %v1556, 7
  %v1558 = vsub.s32 0, %v1557
  %v1559 = vrot.slane %v1554, %v1558
  %v1562 = vsel %vm457, %v1541, 0
  %1564 = vmatprep.subr.mxu0 0.0
  %1565 = vmatpush1.msra.mxu0 %v1542
  %1566 = vmatprep.subr.mxu0 0.0
  %1567 = vmatpush1.msra.mxu0 %v1543
  %1568 = vmatprep.subr.mxu0 0.0
  %1569 = vmatpush1.msra.mxu0 %v1544
  %1570 = vmatprep.subr.mxu0 0.0
  %1571 = vmatpush1.msra.mxu0 %v1545
  %1572 = vmatprep.subr.mxu0 0.0
  %1573 = vmatpush1.msra.mxu0 %v1546
  %1574 = vmatprep.subr.mxu0 0.0
  %1575 = vmatpush1.msra.mxu0 %v1547
  %1576 = vmatprep.subr.mxu0 0.0
  %1577 = vmatpush1.msra.mxu0 %v1548
  %1578 = vmatprep.subr.mxu0 0.0
  %1579 = vmatpush1.msra.mxu0 %v1549
  %1580 = vmatprep.subr.mxu0 0.0
  %1581 = vmatpush1.msra.mxu0 %v1550
  %1582 = vmatprep.subr.mxu0 0.0
  %1583 = vmatpush1.msra.mxu0 %v1551
  %1584 = vmatprep.subr.mxu0 0.0
  %1585 = vmatpush1.msra.mxu0 %v1552
  %1586 = vmatprep.subr.mxu0 0.0
  %1587 = vmatpush1.msra.mxu0 %v1553
  %1588 = vmatprep.subr.mxu0 0.0
  %1589 = vmatpush1.msra.mxu0 0.0
  %1590 = vmatprep.subr.mxu0 0.0
  %1591 = vmatpush1.msra.mxu0 0.0
  %1592 = vmatprep.subr.mxu0 0.0
  %1593 = vmatpush1.msra.mxu0 0.0
  %1594 = vmatprep.subr.mxu0 0.0
  %1595 = vmatpush1.msra.mxu0 0.0
  %1596 = vmatprep.subr.mxu0 0.0
  %1597 = vmatpush1.msra.mxu0 0.0
  %1598 = vmatprep.subr.mxu0 0.0
  %1599 = vmatpush1.msra.mxu0 0.0
  %1600 = vmatprep.subr.mxu0 0.0
  %1601 = vmatpush1.msra.mxu0 0.0
  %1602 = vmatprep.subr.mxu0 0.0
  %1603 = vmatpush1.msra.mxu0 0.0
  %1604 = vmatprep.subr.mxu0 0.0
  %1605 = vmatpush1.msra.mxu0 0.0
  %1606 = vmatprep.subr.mxu0 0.0
  %1607 = vmatpush1.msra.mxu0 0.0
  %1608 = vmatprep.subr.mxu0 0.0
  %1609 = vmatpush1.msra.mxu0 0.0
  %1610 = vmatprep.subr.mxu0 0.0
  %1611 = vmatpush1.msra.mxu0 0.0
  %1612 = vmatprep.subr.mxu0 0.0
  %1613 = vmatpush1.msra.mxu0 0.0
  %1614 = vmatprep.subr.mxu0 0.0
  %1615 = vmatpush1.msra.mxu0 0.0
  %1616 = vmatprep.subr.mxu0 0.0
  %1617 = vmatpush1.msra.mxu0 0.0
  %1618 = vmatprep.subr.mxu0 0.0
  %1619 = vmatpush1.msra.mxu0 0.0
  %1620 = vmatprep.subr.mxu0 0.0
  %1621 = vmatpush1.msra.mxu0 0.0
  %1622 = vmatprep.subr.mxu0 0.0
  %1623 = vmatpush1.msra.mxu0 0.0
  %1624 = vmatprep.subr.mxu0 0.0
  %1625 = vmatpush1.msra.mxu0 0.0
  %1626 = vmatprep.subr.mxu0 0.0
  %1627 = vmatpush1.msra.mxu0 0.0
  %1628 = vmatprep.mubr.f32.mxu0 0.0
  %1629 = vmatmul.mubr.f32.gmra.mrb[0].mxu0 %v1562
  %v1630 = vpop.f32.mrb[0].mxu0
  %v1631 = vadd.f32 %v1559, %v1630
  %v1632 = vpop.f32.mrb[0].mxu0
  %1633 = vdwg.mxu0
  %v1634 = vxor.u32 %v1631, 2147483648
  %v1635 = vmul.f32 %v1634, 1.442695
  %v1636 = vpow.pop %v1635
  %v1637 = vadd.f32 %v1636, 1.0
  %v1638 = vrcp.pop %v1637
  %v1639 = vmul.f32 1.0, %v1638
  %vm1640 = vcmask 44032
  %1641 = vst.msk [vmem:[%s28] sm:$0xf] %vm1640, %v1639
  // Predicated region
  $region114: #{pepnet_forward.1} parent=0 // pred_check
    _
  $region115: #{pepnet_forward.1} parent=0 // pred_check_branch
    %1643 = sbr.rel (0) target = $region117
  $region116: #{pepnet_forward.1} parent=0 // pred_region
    _
  $region117: #{pepnet_forward.1} parent=0 // pred_fallthru
    _
  // Predicated region
  $region118: #{pepnet_forward.1} parent=0 // pred_check
    _
  $region119: #{pepnet_forward.1} parent=0 // pred_check_branch
    %1645 = sbr.rel (0) target = $region121
  $region120: #{pepnet_forward.1} parent=0 // pred_region
    _
  $region121: #{pepnet_forward.1} parent=0 // pred_fallthru
    _

</llo_original>
